<compile_context>
chip_gen: v6e
topology: v6e:2x2x1
jax: 0.10.0
libtpu: 0.0.40
codegen_flags: <defaults>
</compile_context>

<pallas_src>
import jax
import jax.numpy as jnp
from jax.experimental import pallas as pl
from jax.experimental.pallas import tpu as pltpu

EPS = 1e-5  # PyTorch BatchNorm1d default eps

# (C_in, C_out, K, stride, padding, has_batchnorm, activation)
LAYER_CFG = [
    (1, 64, 4, 2, 3, True, "relu"),
    (64, 32, 4, 2, 1, True, "relu"),
    (32, 16, 4, 2, 1, True, "relu"),
    (16, 8, 4, 2, 1, True, "relu"),
    (8, 1, 4, 2, 1, False, "tanh"),
]

_BN_COUT = (64, 32, 16, 8)
_G_OFF = tuple(int(sum(_BN_COUT[:i])) for i in range(4))        # (0, 64, 96, 112)
_B_OFF = tuple(int(sum(_BN_COUT)) + o for o in _G_OFF)          # (120, 184, 216, 232)
_GB_ROWS = 2 * int(sum(_BN_COUT))                               # 240

# In-kernel layer table for layers 2..5 (polyphase residue blocks):
#   (weight-arg index, R = #input residue blocks, cin, cout, gamma off, beta off)
_POLY_CFG = [
    (0, 2, 64, 32, _G_OFF[1], _B_OFF[1]),
    (1, 4, 32, 16, _G_OFF[2], _B_OFF[2]),
    (2, 8, 16, 8, _G_OFF[3], _B_OFF[3]),
    (3, 16, 8, 1, None, None),
]


def _make_kernel(n, l2):
    """Build the fused kernel for batch n, residue lane-width l2 = L_in - 2."""
    lanes = n * l2

    def kernel(x_ref, w1_ref, w2_ref, w3_ref, w4_ref, w5_ref, gb_ref, o_ref):
        w_refs = (w2_ref, w3_ref, w4_ref, w5_ref)

        # ---- per-sample lane shifts (zero-padded at each sample boundary) --
        def shift_right(blk):       # out[:, j] = blk[:, j-1]; 0 at j == 0
            z = jnp.zeros((blk.shape[0], 1), blk.dtype)
            parts = []
            for b in range(n):
                parts.append(z)
                parts.append(blk[:, b * l2:b * l2 + l2 - 1])
            return jnp.concatenate(parts, axis=1)

        def shift_left(blk):        # out[:, j] = blk[:, j+1]; 0 at j == l2-1
            z = jnp.zeros((blk.shape[0], 1), blk.dtype)
            parts = []
            for b in range(n):
                parts.append(blk[:, b * l2 + 1:(b + 1) * l2])
                parts.append(z)
            return jnp.concatenate(parts, axis=1)

        # ---- BatchNorm1d (training-mode biased stats) + ReLU, all f32, 2-D -
        def bn_relu(out, nblk, cout, g_off, b_off):
            gamma = gb_ref[g_off:g_off + cout, :]            # (cout, 1)
            beta = gb_ref[b_off:b_off + cout, :]
            inv_cnt = 1.0 / float(nblk * lanes)              # = 1 / (N * L_out)
            r1 = jnp.sum(out, axis=1, keepdims=True)         # (nblk*cout, 1)
            r2 = jnp.sum(out * out, axis=1, keepdims=True)
            s1 = r1[0:cout, :]
            s2 = r2[0:cout, :]
            for s in range(1, nblk):                         # fold residue blocks
                s1 = s1 + r1[s * cout:(s + 1) * cout, :]
                s2 = s2 + r2[s * cout:(s + 1) * cout, :]
            mean = s1 * inv_cnt
            var = jnp.maximum(s2 * inv_cnt - mean * mean, 0.0)
            scale = gamma * jax.lax.rsqrt(var + EPS)
            shift = beta - mean * scale
            scale_f = jnp.concatenate([scale] * nblk, axis=0)  # (nblk*cout, 1)
            shift_f = jnp.concatenate([shift] * nblk, axis=0)
            return jnp.maximum(out * scale_f + shift_f, 0.0)

        # ---- layer 1: ConvT1d(1->64, k4, s2, p3) as 3 VPU broadcast-FMAs ---
        # rows 0..63  = even outputs  z[2j]   = W1 x[j+1] + W3 x[j]
        # rows 64..127= odd  outputs  z[2j+1] = W2 x[j+1] + W0 x[j+2]
        xt = x_ref[...]                                      # (3, lanes) f32 taps
        w1 = w1_ref[...]                                     # (128, 3)   f32
        act = (w1[:, 0:1] * xt[0:1, :]
               + w1[:, 1:2] * xt[1:2, :]
               + w1[:, 2:3] * xt[2:3, :])                    # (128, lanes) f32
        act = bn_relu(act, 2, 64, _G_OFF[0], _B_OFF[0])

        # ---- layers 2..5: polyphase ConvT1d == ONE MXU matmul per layer ----
        # Input y of length R*l2 is carried as R residue blocks
        #   P_q[:, j] = y[:, R*j + q]   (rows q*cin .. (q+1)*cin of `act`).
        # Output residue block s=2q   : W1 P_q + W3 (P_{q-1} | shifted P_{R-1})
        #               block s=2q+1 : W2 P_q + W0 (P_{q+1} | shifted P_0)
        # so the im2col RHS is [P_0..P_{R-1}, shr(P_{R-1}), shl(P_0)].
        for (wi, R, cin, cout, g_off, b_off) in _POLY_CFG:
            first = act[0:cin, :]
            last = act[(R - 1) * cin:R * cin, :]
            rhs = jnp.concatenate(
                [act, shift_right(last), shift_left(first)], axis=0)
            out = jnp.dot(w_refs[wi][...], rhs.astype(jnp.bfloat16),
                          preferred_element_type=jnp.float32)  # (2R*cout, lanes)
            if g_off is not None:
                act = bn_relu(out, 2 * R, cout, g_off, b_off)
            else:
                # Final layer (cout=1): 32 residue blocks -> single dense store.
                o_ref[...] = jnp.tanh(out)                     # (32, lanes) f32

    return kernel


# ------------------------ one-time weight packing ---------------------------
def _pack_poly_weight(w_pt, R):
    """PyTorch ConvT1d weight (cin, cout, 4) -> polyphase-composed matrix
    (2R*cout, (R+2)*cin) for an input carried as R residue blocks."""
    cin, cout, K = w_pt.shape
    Wk = [jnp.transpose(w_pt[:, :, k]) for k in range(K)]       # (cout, cin)
    Z = jnp.zeros((cout, cin), w_pt.dtype)
    rows = []
    for q in range(R):
        blocks = [Z] * (R + 2)                                  # even block s=2q
        blocks[q] = Wk[1]
        if q >= 1:
            blocks[q - 1] = Wk[3]
        else:
            blocks[R] = Wk[3]                                   # shifted P_{R-1}
        rows.append(jnp.concatenate(blocks, axis=1))
        blocks = [Z] * (R + 2)                                  # odd block s=2q+1
        blocks[q] = Wk[2]
        if q <= R - 2:
            blocks[q + 1] = Wk[0]
        else:
            blocks[R + 1] = Wk[0]                               # shifted P_0
        rows.append(jnp.concatenate(blocks, axis=1))
    return jnp.concatenate(rows, axis=0)


def pack_generator_params(params):
    """Run once outside the per-call path (weights static at inference)."""
    w1 = params[0][0]                                           # (1, 64, 4)
    zero = jnp.zeros((64,), w1.dtype)
    col0 = jnp.concatenate([w1[0, :, 3], zero])                 # tap x[j]
    col1 = jnp.concatenate([w1[0, :, 1], w1[0, :, 2]])          # tap x[j+1]
    col2 = jnp.concatenate([zero, w1[0, :, 0]])                 # tap x[j+2]
    w1p = jnp.stack([col0, col1, col2], axis=1).astype(jnp.float32)   # (128, 3)

    w_polys = [
        _pack_poly_weight(w, R).astype(jnp.bfloat16)
        for (w, _g, _b), R in zip(params[1:], (2, 4, 8, 16))
    ]
    gammas = [params[i][1].reshape(-1) for i in range(4)]
    betas = [params[i][2].reshape(-1) for i in range(4)]
    gb = (jnp.concatenate(gammas + betas)
          .reshape(_GB_ROWS, 1).astype(jnp.float32))            # (240, 1)
    return (w1p, *w_polys, gb)


@jax.jit
def generator_forward(packed, x):
    """Whole 5-layer Generator forward pass as one fused Pallas kernel."""
    w1p, w2p, w3p, w4p, w5p, gb = packed
    n = x.shape[0]
    l2 = x.shape[-1] - 2                 # residue lane-width (16 -> 14)
    lanes = n * l2

    # im2col of the tiny (n, 1, 16) input: taps x[j], x[j+1], x[j+2] -> (3, n*l2).
    x2 = x[:, 0, :].astype(jnp.float32)
    x_taps = jnp.stack([x2[:, 0:l2], x2[:, 1:1 + l2], x2[:, 2:2 + l2]],
                       axis=0).reshape(3, lanes)

    vmem = pl.BlockSpec(memory_space=pltpu.MemorySpace.VMEM)
    out = pl.pallas_call(
        _make_kernel(n, l2),
        out_shape=jax.ShapeDtypeStruct((32, lanes), jnp.float32),
        in_specs=[vmem] * 7,
        out_specs=vmem,
    )(x_taps, w1p, w2p, w3p, w4p, w5p, gb)

    # Undo the polyphase layout (free XLA glue on ~3.5 KB):
    #   out[s, l2*b + j] == y[b, 0, 32*j + s]
    out = out.reshape(32, n, l2)
    return jnp.transpose(out, (1, 2, 0)).reshape(n, 1, 32 * l2)


def init_generator_params(key):
    params = []
    for (cin, cout, k, _s, _p, bn, _act) in LAYER_CFG:
        key, kw, kg, kb = jax.random.split(key, 4)
        fan = cin * k
        w = jax.random.normal(kw, (cin, cout, k), jnp.float32) / jnp.sqrt(fan)
        if bn:
            gamma = 1.0 + 0.1 * jax.random.normal(kg, (1, cout, 1), jnp.float32)
            beta = 0.1 * jax.random.normal(kb, (1, cout, 1), jnp.float32)
        else:
            gamma = jnp.ones((1, cout, 1), jnp.float32)
            beta = jnp.zeros((1, cout, 1), jnp.float32)
        params.append((w, gamma, beta))
    return params


# ---------------- pure-JAX reference (independent lowering path) ------------
def _ref_layer(x, w_pt, gamma, beta, *, stride, padding, apply_bn, act):
    k = w_pt.shape[2]
    w = jnp.transpose(w_pt[:, :, ::-1], (1, 0, 2))       # (C_out, C_in, K)
    y = jax.lax.conv_general_dilated(
        x, w, window_strides=(1,),
        padding=[(k - 1 - padding, k - 1 - padding)],
        lhs_dilation=(stride,), rhs_dilation=(1,),
        dimension_numbers=("NCH", "OIH", "NCH"),
        precision=jax.lax.Precision.HIGHEST)
    if apply_bn:
        mean = jnp.mean(y, axis=(0, 2), keepdims=True)
        var = jnp.mean(jnp.square(y - mean), axis=(0, 2), keepdims=True)
        y = (y - mean) * jax.lax.rsqrt(var + EPS) * gamma + beta
    if act == "relu":
        y = jnp.maximum(y, 0.0)
    else:
        y = jnp.tanh(y)
    return y


if __name__ == "__main__":
    key = jax.random.PRNGKey(0)
    kp, kx = jax.random.split(key)
    params = init_generator_params(kp)
    packed = pack_generator_params(params)   # one-time, outside the call path

    # Input: (batch=2, channels=1, length=16)  ->  output (2, 1, 448)
    x = jax.random.normal(kx, (2, 1, 16), jnp.float32)

    out = jax.block_until_ready(generator_forward(packed, x))
    assert out.shape == (2, 1, 448), out.shape

    ref = x
    for (w, g, b), (_cin, _cout, k, s, p, bn, act) in zip(params, LAYER_CFG):
        ref = _ref_layer(ref, w, g, b, stride=s, padding=p, apply_bn=bn, act=act)
    max_err = float(jnp.max(jnp.abs(out - ref)))
    # Kernel uses bf16 MXU weights (f32 accumulation, f32 activations/BN);
    # reference is pure f32/HIGHEST, hence the looser tolerance.
    assert jnp.allclose(out, ref, atol=5e-2, rtol=5e-2), max_err

    print("KERNEL_OK")
</pallas_src>

<mosaic_0001>
module attributes {stable_mosaic.version = 11 : i64} {
  func.func @kernel(%arg0: memref<3x28xf32, #tpu.memory_space<vmem>>, %arg1: memref<128x3xf32, #tpu.memory_space<vmem>>, %arg2: memref<128x256xbf16, #tpu.memory_space<vmem>>, %arg3: memref<128x192xbf16, #tpu.memory_space<vmem>>, %arg4: memref<128x160xbf16, #tpu.memory_space<vmem>>, %arg5: memref<32x144xbf16, #tpu.memory_space<vmem>>, %arg6: memref<240x1xf32, #tpu.memory_space<vmem>>, %arg7: memref<32x28xf32, #tpu.memory_space<vmem>>) attributes {dimension_semantics = [], scalar_prefetch = 0 : i64, scratch_operands = 0 : i64, tpu.core_type = #tpu.core_type<tc>} {
    %c0 = arith.constant 0 : index
    %c0_0 = arith.constant 0 : index
    %0 = vector.load %arg0[%c0, %c0_0] : memref<3x28xf32, #tpu.memory_space<vmem>>, vector<3x28xf32>
    %c0_1 = arith.constant 0 : index
    %c0_2 = arith.constant 0 : index
    %1 = vector.load %arg1[%c0_1, %c0_2] : memref<128x3xf32, #tpu.memory_space<vmem>>, vector<128x3xf32>
    %2 = vector.extract_strided_slice %1 {offsets = [0, 0], sizes = [128, 1], strides = [1, 1]} : vector<128x3xf32> to vector<128x1xf32>
    %3 = vector.extract_strided_slice %0 {offsets = [0, 0], sizes = [1, 28], strides = [1, 1]} : vector<3x28xf32> to vector<1x28xf32>
    %4 = vector.broadcast %2 : vector<128x1xf32> to vector<128x28xf32>
    %5 = vector.broadcast %3 : vector<1x28xf32> to vector<128x28xf32>
    %6 = arith.mulf %4, %5 : vector<128x28xf32>
    %7 = vector.extract_strided_slice %1 {offsets = [0, 1], sizes = [128, 1], strides = [1, 1]} : vector<128x3xf32> to vector<128x1xf32>
    %8 = vector.extract_strided_slice %0 {offsets = [1, 0], sizes = [1, 28], strides = [1, 1]} : vector<3x28xf32> to vector<1x28xf32>
    %9 = vector.broadcast %7 : vector<128x1xf32> to vector<128x28xf32>
    %10 = vector.broadcast %8 : vector<1x28xf32> to vector<128x28xf32>
    %11 = arith.mulf %9, %10 : vector<128x28xf32>
    %12 = arith.addf %6, %11 : vector<128x28xf32>
    %13 = vector.extract_strided_slice %1 {offsets = [0, 2], sizes = [128, 1], strides = [1, 1]} : vector<128x3xf32> to vector<128x1xf32>
    %14 = vector.extract_strided_slice %0 {offsets = [2, 0], sizes = [1, 28], strides = [1, 1]} : vector<3x28xf32> to vector<1x28xf32>
    %15 = vector.broadcast %13 : vector<128x1xf32> to vector<128x28xf32>
    %16 = vector.broadcast %14 : vector<1x28xf32> to vector<128x28xf32>
    %17 = arith.mulf %15, %16 : vector<128x28xf32>
    %18 = arith.addf %12, %17 : vector<128x28xf32>
    %c0_3 = arith.constant 0 : index
    %c0_4 = arith.constant 0 : index
    %19 = vector.load %arg6[%c0_3, %c0_4] : memref<240x1xf32, #tpu.memory_space<vmem>>, vector<64x1xf32>
    %c120 = arith.constant 120 : index
    %c0_5 = arith.constant 0 : index
    %20 = vector.load %arg6[%c120, %c0_5] : memref<240x1xf32, #tpu.memory_space<vmem>>, vector<64x1xf32>
    %cst = arith.constant dense<0.000000e+00> : vector<128xf32>
    %21 = vector.multi_reduction <add>, %18, %cst [1] : vector<128x28xf32> to vector<128xf32>
    %22 = vector.shape_cast %21 : vector<128xf32> to vector<128x1xf32>
    %23 = arith.mulf %18, %18 : vector<128x28xf32>
    %cst_6 = arith.constant dense<0.000000e+00> : vector<128xf32>
    %24 = vector.multi_reduction <add>, %23, %cst_6 [1] : vector<128x28xf32> to vector<128xf32>
    %25 = vector.shape_cast %24 : vector<128xf32> to vector<128x1xf32>
    %26 = vector.extract_strided_slice %22 {offsets = [0, 0], sizes = [64, 1], strides = [1, 1]} : vector<128x1xf32> to vector<64x1xf32>
    %27 = vector.extract_strided_slice %25 {offsets = [0, 0], sizes = [64, 1], strides = [1, 1]} : vector<128x1xf32> to vector<64x1xf32>
    %28 = vector.extract_strided_slice %22 {offsets = [64, 0], sizes = [64, 1], strides = [1, 1]} : vector<128x1xf32> to vector<64x1xf32>
    %29 = arith.addf %26, %28 : vector<64x1xf32>
    %30 = vector.extract_strided_slice %25 {offsets = [64, 0], sizes = [64, 1], strides = [1, 1]} : vector<128x1xf32> to vector<64x1xf32>
    %31 = arith.addf %27, %30 : vector<64x1xf32>
    %cst_7 = arith.constant 0.0178571437 : f32
    %32 = vector.broadcast %cst_7 : f32 to vector<64x1xf32>
    %33 = arith.mulf %29, %32 : vector<64x1xf32>
    %cst_8 = arith.constant 0.0178571437 : f32
    %34 = vector.broadcast %cst_8 : f32 to vector<64x1xf32>
    %35 = arith.mulf %31, %34 : vector<64x1xf32>
    %36 = arith.mulf %33, %33 : vector<64x1xf32>
    %37 = arith.subf %35, %36 : vector<64x1xf32>
    %cst_9 = arith.constant 0.000000e+00 : f32
    %38 = vector.broadcast %cst_9 : f32 to vector<64x1xf32>
    %39 = arith.maximumf %37, %38 : vector<64x1xf32>
    %cst_10 = arith.constant 9.99999974E-6 : f32
    %40 = vector.broadcast %cst_10 : f32 to vector<64x1xf32>
    %41 = arith.addf %39, %40 : vector<64x1xf32>
    %42 = math.rsqrt %41 : vector<64x1xf32>
    %43 = arith.mulf %19, %42 : vector<64x1xf32>
    %44 = arith.mulf %33, %43 : vector<64x1xf32>
    %45 = arith.subf %20, %44 : vector<64x1xf32>
    %46 = tpu.concatenate %43, %43 in 0 : vector<64x1xf32>, vector<64x1xf32> -> vector<128x1xf32>
    %47 = tpu.concatenate %45, %45 in 0 : vector<64x1xf32>, vector<64x1xf32> -> vector<128x1xf32>
    %48 = vector.broadcast %46 : vector<128x1xf32> to vector<128x28xf32>
    %49 = arith.mulf %18, %48 : vector<128x28xf32>
    %50 = vector.broadcast %47 : vector<128x1xf32> to vector<128x28xf32>
    %51 = arith.addf %49, %50 : vector<128x28xf32>
    %cst_11 = arith.constant 0.000000e+00 : f32
    %52 = vector.broadcast %cst_11 : f32 to vector<128x28xf32>
    %53 = arith.maximumf %51, %52 : vector<128x28xf32>
    %54 = vector.extract_strided_slice %53 {offsets = [0, 0], sizes = [64, 28], strides = [1, 1]} : vector<128x28xf32> to vector<64x28xf32>
    %55 = vector.extract_strided_slice %53 {offsets = [64, 0], sizes = [64, 28], strides = [1, 1]} : vector<128x28xf32> to vector<64x28xf32>
    %cst_12 = arith.constant 0.000000e+00 : f32
    %56 = vector.broadcast %cst_12 : f32 to vector<64x1xf32>
    %57 = vector.extract_strided_slice %55 {offsets = [0, 0], sizes = [64, 13], strides = [1, 1]} : vector<64x28xf32> to vector<64x13xf32>
    %58 = vector.extract_strided_slice %55 {offsets = [0, 14], sizes = [64, 13], strides = [1, 1]} : vector<64x28xf32> to vector<64x13xf32>
    %59 = tpu.concatenate %56, %57, %56, %58 in 1 : vector<64x1xf32>, vector<64x13xf32>, vector<64x1xf32>, vector<64x13xf32> -> vector<64x28xf32>
    %cst_13 = arith.constant 0.000000e+00 : f32
    %60 = vector.broadcast %cst_13 : f32 to vector<64x1xf32>
    %61 = vector.extract_strided_slice %54 {offsets = [0, 1], sizes = [64, 13], strides = [1, 1]} : vector<64x28xf32> to vector<64x13xf32>
    %62 = vector.extract_strided_slice %54 {offsets = [0, 15], sizes = [64, 13], strides = [1, 1]} : vector<64x28xf32> to vector<64x13xf32>
    %63 = tpu.concatenate %61, %60, %62, %60 in 1 : vector<64x13xf32>, vector<64x1xf32>, vector<64x13xf32>, vector<64x1xf32> -> vector<64x28xf32>
    %64 = tpu.concatenate %53, %59, %63 in 0 : vector<128x28xf32>, vector<64x28xf32>, vector<64x28xf32> -> vector<256x28xf32>
    %c0_14 = arith.constant 0 : index
    %c0_15 = arith.constant 0 : index
    %65 = vector.load %arg2[%c0_14, %c0_15] : memref<128x256xbf16, #tpu.memory_space<vmem>>, vector<128x256xbf16>
    %66 = arith.truncf %64 : vector<256x28xf32> to vector<256x28xbf16>
    %cst_16 = arith.constant dense<0.000000e+00> : vector<128x28xf32>
    %67 = tpu.matmul %65, %66, %cst_16 {dimension_numbers = #tpu.dot_dimension_numbers<[1], [0], [0], [1], [0, 0, 1, 1], [], []>} : vector<128x256xbf16>, vector<256x28xbf16>, vector<128x28xf32> -> vector<128x28xf32>
    %c64 = arith.constant 64 : index
    %c0_17 = arith.constant 0 : index
    %68 = vector.load %arg6[%c64, %c0_17] : memref<240x1xf32, #tpu.memory_space<vmem>>, vector<32x1xf32>
    %c184 = arith.constant 184 : index
    %c0_18 = arith.constant 0 : index
    %69 = vector.load %arg6[%c184, %c0_18] : memref<240x1xf32, #tpu.memory_space<vmem>>, vector<32x1xf32>
    %cst_19 = arith.constant dense<0.000000e+00> : vector<128xf32>
    %70 = vector.multi_reduction <add>, %67, %cst_19 [1] : vector<128x28xf32> to vector<128xf32>
    %71 = vector.shape_cast %70 : vector<128xf32> to vector<128x1xf32>
    %72 = arith.mulf %67, %67 : vector<128x28xf32>
    %cst_20 = arith.constant dense<0.000000e+00> : vector<128xf32>
    %73 = vector.multi_reduction <add>, %72, %cst_20 [1] : vector<128x28xf32> to vector<128xf32>
    %74 = vector.shape_cast %73 : vector<128xf32> to vector<128x1xf32>
    %75 = vector.extract_strided_slice %71 {offsets = [0, 0], sizes = [32, 1], strides = [1, 1]} : vector<128x1xf32> to vector<32x1xf32>
    %76 = vector.extract_strided_slice %74 {offsets = [0, 0], sizes = [32, 1], strides = [1, 1]} : vector<128x1xf32> to vector<32x1xf32>
    %77 = vector.extract_strided_slice %71 {offsets = [32, 0], sizes = [32, 1], strides = [1, 1]} : vector<128x1xf32> to vector<32x1xf32>
    %78 = arith.addf %75, %77 : vector<32x1xf32>
    %79 = vector.extract_strided_slice %74 {offsets = [32, 0], sizes = [32, 1], strides = [1, 1]} : vector<128x1xf32> to vector<32x1xf32>
    %80 = arith.addf %76, %79 : vector<32x1xf32>
    %81 = vector.extract_strided_slice %71 {offsets = [64, 0], sizes = [32, 1], strides = [1, 1]} : vector<128x1xf32> to vector<32x1xf32>
    %82 = arith.addf %78, %81 : vector<32x1xf32>
    %83 = vector.extract_strided_slice %74 {offsets = [64, 0], sizes = [32, 1], strides = [1, 1]} : vector<128x1xf32> to vector<32x1xf32>
    %84 = arith.addf %80, %83 : vector<32x1xf32>
    %85 = vector.extract_strided_slice %71 {offsets = [96, 0], sizes = [32, 1], strides = [1, 1]} : vector<128x1xf32> to vector<32x1xf32>
    %86 = arith.addf %82, %85 : vector<32x1xf32>
    %87 = vector.extract_strided_slice %74 {offsets = [96, 0], sizes = [32, 1], strides = [1, 1]} : vector<128x1xf32> to vector<32x1xf32>
    %88 = arith.addf %84, %87 : vector<32x1xf32>
    %cst_21 = arith.constant 0.00892857183 : f32
    %89 = vector.broadcast %cst_21 : f32 to vector<32x1xf32>
    %90 = arith.mulf %86, %89 : vector<32x1xf32>
    %cst_22 = arith.constant 0.00892857183 : f32
    %91 = vector.broadcast %cst_22 : f32 to vector<32x1xf32>
    %92 = arith.mulf %88, %91 : vector<32x1xf32>
    %93 = arith.mulf %90, %90 : vector<32x1xf32>
    %94 = arith.subf %92, %93 : vector<32x1xf32>
    %cst_23 = arith.constant 0.000000e+00 : f32
    %95 = vector.broadcast %cst_23 : f32 to vector<32x1xf32>
    %96 = arith.maximumf %94, %95 : vector<32x1xf32>
    %cst_24 = arith.constant 9.99999974E-6 : f32
    %97 = vector.broadcast %cst_24 : f32 to vector<32x1xf32>
    %98 = arith.addf %96, %97 : vector<32x1xf32>
    %99 = math.rsqrt %98 : vector<32x1xf32>
    %100 = arith.mulf %68, %99 : vector<32x1xf32>
    %101 = arith.mulf %90, %100 : vector<32x1xf32>
    %102 = arith.subf %69, %101 : vector<32x1xf32>
    %103 = tpu.concatenate %100, %100, %100, %100 in 0 : vector<32x1xf32>, vector<32x1xf32>, vector<32x1xf32>, vector<32x1xf32> -> vector<128x1xf32>
    %104 = tpu.concatenate %102, %102, %102, %102 in 0 : vector<32x1xf32>, vector<32x1xf32>, vector<32x1xf32>, vector<32x1xf32> -> vector<128x1xf32>
    %105 = vector.broadcast %103 : vector<128x1xf32> to vector<128x28xf32>
    %106 = arith.mulf %67, %105 : vector<128x28xf32>
    %107 = vector.broadcast %104 : vector<128x1xf32> to vector<128x28xf32>
    %108 = arith.addf %106, %107 : vector<128x28xf32>
    %cst_25 = arith.constant 0.000000e+00 : f32
    %109 = vector.broadcast %cst_25 : f32 to vector<128x28xf32>
    %110 = arith.maximumf %108, %109 : vector<128x28xf32>
    %111 = vector.extract_strided_slice %110 {offsets = [0, 0], sizes = [32, 28], strides = [1, 1]} : vector<128x28xf32> to vector<32x28xf32>
    %112 = vector.extract_strided_slice %110 {offsets = [96, 0], sizes = [32, 28], strides = [1, 1]} : vector<128x28xf32> to vector<32x28xf32>
    %cst_26 = arith.constant 0.000000e+00 : f32
    %113 = vector.broadcast %cst_26 : f32 to vector<32x1xf32>
    %114 = vector.extract_strided_slice %112 {offsets = [0, 0], sizes = [32, 13], strides = [1, 1]} : vector<32x28xf32> to vector<32x13xf32>
    %115 = vector.extract_strided_slice %112 {offsets = [0, 14], sizes = [32, 13], strides = [1, 1]} : vector<32x28xf32> to vector<32x13xf32>
    %116 = tpu.concatenate %113, %114, %113, %115 in 1 : vector<32x1xf32>, vector<32x13xf32>, vector<32x1xf32>, vector<32x13xf32> -> vector<32x28xf32>
    %cst_27 = arith.constant 0.000000e+00 : f32
    %117 = vector.broadcast %cst_27 : f32 to vector<32x1xf32>
    %118 = vector.extract_strided_slice %111 {offsets = [0, 1], sizes = [32, 13], strides = [1, 1]} : vector<32x28xf32> to vector<32x13xf32>
    %119 = vector.extract_strided_slice %111 {offsets = [0, 15], sizes = [32, 13], strides = [1, 1]} : vector<32x28xf32> to vector<32x13xf32>
    %120 = tpu.concatenate %118, %117, %119, %117 in 1 : vector<32x13xf32>, vector<32x1xf32>, vector<32x13xf32>, vector<32x1xf32> -> vector<32x28xf32>
    %121 = tpu.concatenate %110, %116, %120 in 0 : vector<128x28xf32>, vector<32x28xf32>, vector<32x28xf32> -> vector<192x28xf32>
    %c0_28 = arith.constant 0 : index
    %c0_29 = arith.constant 0 : index
    %122 = vector.load %arg3[%c0_28, %c0_29] : memref<128x192xbf16, #tpu.memory_space<vmem>>, vector<128x192xbf16>
    %123 = arith.truncf %121 : vector<192x28xf32> to vector<192x28xbf16>
    %cst_30 = arith.constant dense<0.000000e+00> : vector<128x28xf32>
    %124 = tpu.matmul %122, %123, %cst_30 {dimension_numbers = #tpu.dot_dimension_numbers<[1], [0], [0], [1], [0, 0, 1, 1], [], []>} : vector<128x192xbf16>, vector<192x28xbf16>, vector<128x28xf32> -> vector<128x28xf32>
    %c96 = arith.constant 96 : index
    %c0_31 = arith.constant 0 : index
    %125 = vector.load %arg6[%c96, %c0_31] : memref<240x1xf32, #tpu.memory_space<vmem>>, vector<16x1xf32>
    %c216 = arith.constant 216 : index
    %c0_32 = arith.constant 0 : index
    %126 = vector.load %arg6[%c216, %c0_32] : memref<240x1xf32, #tpu.memory_space<vmem>>, vector<16x1xf32>
    %cst_33 = arith.constant dense<0.000000e+00> : vector<128xf32>
    %127 = vector.multi_reduction <add>, %124, %cst_33 [1] : vector<128x28xf32> to vector<128xf32>
    %128 = vector.shape_cast %127 : vector<128xf32> to vector<128x1xf32>
    %129 = arith.mulf %124, %124 : vector<128x28xf32>
    %cst_34 = arith.constant dense<0.000000e+00> : vector<128xf32>
    %130 = vector.multi_reduction <add>, %129, %cst_34 [1] : vector<128x28xf32> to vector<128xf32>
    %131 = vector.shape_cast %130 : vector<128xf32> to vector<128x1xf32>
    %132 = vector.extract_strided_slice %128 {offsets = [0, 0], sizes = [16, 1], strides = [1, 1]} : vector<128x1xf32> to vector<16x1xf32>
    %133 = vector.extract_strided_slice %131 {offsets = [0, 0], sizes = [16, 1], strides = [1, 1]} : vector<128x1xf32> to vector<16x1xf32>
    %134 = vector.extract_strided_slice %128 {offsets = [16, 0], sizes = [16, 1], strides = [1, 1]} : vector<128x1xf32> to vector<16x1xf32>
    %135 = arith.addf %132, %134 : vector<16x1xf32>
    %136 = vector.extract_strided_slice %131 {offsets = [16, 0], sizes = [16, 1], strides = [1, 1]} : vector<128x1xf32> to vector<16x1xf32>
    %137 = arith.addf %133, %136 : vector<16x1xf32>
    %138 = vector.extract_strided_slice %128 {offsets = [32, 0], sizes = [16, 1], strides = [1, 1]} : vector<128x1xf32> to vector<16x1xf32>
    %139 = arith.addf %135, %138 : vector<16x1xf32>
    %140 = vector.extract_strided_slice %131 {offsets = [32, 0], sizes = [16, 1], strides = [1, 1]} : vector<128x1xf32> to vector<16x1xf32>
    %141 = arith.addf %137, %140 : vector<16x1xf32>
    %142 = vector.extract_strided_slice %128 {offsets = [48, 0], sizes = [16, 1], strides = [1, 1]} : vector<128x1xf32> to vector<16x1xf32>
    %143 = arith.addf %139, %142 : vector<16x1xf32>
    %144 = vector.extract_strided_slice %131 {offsets = [48, 0], sizes = [16, 1], strides = [1, 1]} : vector<128x1xf32> to vector<16x1xf32>
    %145 = arith.addf %141, %144 : vector<16x1xf32>
    %146 = vector.extract_strided_slice %128 {offsets = [64, 0], sizes = [16, 1], strides = [1, 1]} : vector<128x1xf32> to vector<16x1xf32>
    %147 = arith.addf %143, %146 : vector<16x1xf32>
    %148 = vector.extract_strided_slice %131 {offsets = [64, 0], sizes = [16, 1], strides = [1, 1]} : vector<128x1xf32> to vector<16x1xf32>
    %149 = arith.addf %145, %148 : vector<16x1xf32>
    %150 = vector.extract_strided_slice %128 {offsets = [80, 0], sizes = [16, 1], strides = [1, 1]} : vector<128x1xf32> to vector<16x1xf32>
    %151 = arith.addf %147, %150 : vector<16x1xf32>
    %152 = vector.extract_strided_slice %131 {offsets = [80, 0], sizes = [16, 1], strides = [1, 1]} : vector<128x1xf32> to vector<16x1xf32>
    %153 = arith.addf %149, %152 : vector<16x1xf32>
    %154 = vector.extract_strided_slice %128 {offsets = [96, 0], sizes = [16, 1], strides = [1, 1]} : vector<128x1xf32> to vector<16x1xf32>
    %155 = arith.addf %151, %154 : vector<16x1xf32>
    %156 = vector.extract_strided_slice %131 {offsets = [96, 0], sizes = [16, 1], strides = [1, 1]} : vector<128x1xf32> to vector<16x1xf32>
    %157 = arith.addf %153, %156 : vector<16x1xf32>
    %158 = vector.extract_strided_slice %128 {offsets = [112, 0], sizes = [16, 1], strides = [1, 1]} : vector<128x1xf32> to vector<16x1xf32>
    %159 = arith.addf %155, %158 : vector<16x1xf32>
    %160 = vector.extract_strided_slice %131 {offsets = [112, 0], sizes = [16, 1], strides = [1, 1]} : vector<128x1xf32> to vector<16x1xf32>
    %161 = arith.addf %157, %160 : vector<16x1xf32>
    %cst_35 = arith.constant 0.00446428591 : f32
    %162 = vector.broadcast %cst_35 : f32 to vector<16x1xf32>
    %163 = arith.mulf %159, %162 : vector<16x1xf32>
    %cst_36 = arith.constant 0.00446428591 : f32
    %164 = vector.broadcast %cst_36 : f32 to vector<16x1xf32>
    %165 = arith.mulf %161, %164 : vector<16x1xf32>
    %166 = arith.mulf %163, %163 : vector<16x1xf32>
    %167 = arith.subf %165, %166 : vector<16x1xf32>
    %cst_37 = arith.constant 0.000000e+00 : f32
    %168 = vector.broadcast %cst_37 : f32 to vector<16x1xf32>
    %169 = arith.maximumf %167, %168 : vector<16x1xf32>
    %cst_38 = arith.constant 9.99999974E-6 : f32
    %170 = vector.broadcast %cst_38 : f32 to vector<16x1xf32>
    %171 = arith.addf %169, %170 : vector<16x1xf32>
    %172 = math.rsqrt %171 : vector<16x1xf32>
    %173 = arith.mulf %125, %172 : vector<16x1xf32>
    %174 = arith.mulf %163, %173 : vector<16x1xf32>
    %175 = arith.subf %126, %174 : vector<16x1xf32>
    %176 = tpu.concatenate %173, %173, %173, %173, %173, %173, %173, %173 in 0 : vector<16x1xf32>, vector<16x1xf32>, vector<16x1xf32>, vector<16x1xf32>, vector<16x1xf32>, vector<16x1xf32>, vector<16x1xf32>, vector<16x1xf32> -> vector<128x1xf32>
    %177 = tpu.concatenate %175, %175, %175, %175, %175, %175, %175, %175 in 0 : vector<16x1xf32>, vector<16x1xf32>, vector<16x1xf32>, vector<16x1xf32>, vector<16x1xf32>, vector<16x1xf32>, vector<16x1xf32>, vector<16x1xf32> -> vector<128x1xf32>
    %178 = vector.broadcast %176 : vector<128x1xf32> to vector<128x28xf32>
    %179 = arith.mulf %124, %178 : vector<128x28xf32>
    %180 = vector.broadcast %177 : vector<128x1xf32> to vector<128x28xf32>
    %181 = arith.addf %179, %180 : vector<128x28xf32>
    %cst_39 = arith.constant 0.000000e+00 : f32
    %182 = vector.broadcast %cst_39 : f32 to vector<128x28xf32>
    %183 = arith.maximumf %181, %182 : vector<128x28xf32>
    %184 = vector.extract_strided_slice %183 {offsets = [0, 0], sizes = [16, 28], strides = [1, 1]} : vector<128x28xf32> to vector<16x28xf32>
    %185 = vector.extract_strided_slice %183 {offsets = [112, 0], sizes = [16, 28], strides = [1, 1]} : vector<128x28xf32> to vector<16x28xf32>
    %cst_40 = arith.constant 0.000000e+00 : f32
    %186 = vector.broadcast %cst_40 : f32 to vector<16x1xf32>
    %187 = vector.extract_strided_slice %185 {offsets = [0, 0], sizes = [16, 13], strides = [1, 1]} : vector<16x28xf32> to vector<16x13xf32>
    %188 = vector.extract_strided_slice %185 {offsets = [0, 14], sizes = [16, 13], strides = [1, 1]} : vector<16x28xf32> to vector<16x13xf32>
    %189 = tpu.concatenate %186, %187, %186, %188 in 1 : vector<16x1xf32>, vector<16x13xf32>, vector<16x1xf32>, vector<16x13xf32> -> vector<16x28xf32>
    %cst_41 = arith.constant 0.000000e+00 : f32
    %190 = vector.broadcast %cst_41 : f32 to vector<16x1xf32>
    %191 = vector.extract_strided_slice %184 {offsets = [0, 1], sizes = [16, 13], strides = [1, 1]} : vector<16x28xf32> to vector<16x13xf32>
    %192 = vector.extract_strided_slice %184 {offsets = [0, 15], sizes = [16, 13], strides = [1, 1]} : vector<16x28xf32> to vector<16x13xf32>
    %193 = tpu.concatenate %191, %190, %192, %190 in 1 : vector<16x13xf32>, vector<16x1xf32>, vector<16x13xf32>, vector<16x1xf32> -> vector<16x28xf32>
    %194 = tpu.concatenate %183, %189, %193 in 0 : vector<128x28xf32>, vector<16x28xf32>, vector<16x28xf32> -> vector<160x28xf32>
    %c0_42 = arith.constant 0 : index
    %c0_43 = arith.constant 0 : index
    %195 = vector.load %arg4[%c0_42, %c0_43] : memref<128x160xbf16, #tpu.memory_space<vmem>>, vector<128x160xbf16>
    %196 = arith.truncf %194 : vector<160x28xf32> to vector<160x28xbf16>
    %cst_44 = arith.constant dense<0.000000e+00> : vector<128x28xf32>
    %197 = tpu.matmul %195, %196, %cst_44 {dimension_numbers = #tpu.dot_dimension_numbers<[1], [0], [0], [1], [0, 0, 1, 1], [], []>} : vector<128x160xbf16>, vector<160x28xbf16>, vector<128x28xf32> -> vector<128x28xf32>
    %c112 = arith.constant 112 : index
    %c0_45 = arith.constant 0 : index
    %198 = vector.load %arg6[%c112, %c0_45] : memref<240x1xf32, #tpu.memory_space<vmem>>, vector<8x1xf32>
    %c232 = arith.constant 232 : index
    %c0_46 = arith.constant 0 : index
    %199 = vector.load %arg6[%c232, %c0_46] : memref<240x1xf32, #tpu.memory_space<vmem>>, vector<8x1xf32>
    %cst_47 = arith.constant dense<0.000000e+00> : vector<128xf32>
    %200 = vector.multi_reduction <add>, %197, %cst_47 [1] : vector<128x28xf32> to vector<128xf32>
    %201 = vector.shape_cast %200 : vector<128xf32> to vector<128x1xf32>
    %202 = arith.mulf %197, %197 : vector<128x28xf32>
    %cst_48 = arith.constant dense<0.000000e+00> : vector<128xf32>
    %203 = vector.multi_reduction <add>, %202, %cst_48 [1] : vector<128x28xf32> to vector<128xf32>
    %204 = vector.shape_cast %203 : vector<128xf32> to vector<128x1xf32>
    %205 = vector.extract_strided_slice %201 {offsets = [0, 0], sizes = [8, 1], strides = [1, 1]} : vector<128x1xf32> to vector<8x1xf32>
    %206 = vector.extract_strided_slice %204 {offsets = [0, 0], sizes = [8, 1], strides = [1, 1]} : vector<128x1xf32> to vector<8x1xf32>
    %207 = vector.extract_strided_slice %201 {offsets = [8, 0], sizes = [8, 1], strides = [1, 1]} : vector<128x1xf32> to vector<8x1xf32>
    %208 = arith.addf %205, %207 : vector<8x1xf32>
    %209 = vector.extract_strided_slice %204 {offsets = [8, 0], sizes = [8, 1], strides = [1, 1]} : vector<128x1xf32> to vector<8x1xf32>
    %210 = arith.addf %206, %209 : vector<8x1xf32>
    %211 = vector.extract_strided_slice %201 {offsets = [16, 0], sizes = [8, 1], strides = [1, 1]} : vector<128x1xf32> to vector<8x1xf32>
    %212 = arith.addf %208, %211 : vector<8x1xf32>
    %213 = vector.extract_strided_slice %204 {offsets = [16, 0], sizes = [8, 1], strides = [1, 1]} : vector<128x1xf32> to vector<8x1xf32>
    %214 = arith.addf %210, %213 : vector<8x1xf32>
    %215 = vector.extract_strided_slice %201 {offsets = [24, 0], sizes = [8, 1], strides = [1, 1]} : vector<128x1xf32> to vector<8x1xf32>
    %216 = arith.addf %212, %215 : vector<8x1xf32>
    %217 = vector.extract_strided_slice %204 {offsets = [24, 0], sizes = [8, 1], strides = [1, 1]} : vector<128x1xf32> to vector<8x1xf32>
    %218 = arith.addf %214, %217 : vector<8x1xf32>
    %219 = vector.extract_strided_slice %201 {offsets = [32, 0], sizes = [8, 1], strides = [1, 1]} : vector<128x1xf32> to vector<8x1xf32>
    %220 = arith.addf %216, %219 : vector<8x1xf32>
    %221 = vector.extract_strided_slice %204 {offsets = [32, 0], sizes = [8, 1], strides = [1, 1]} : vector<128x1xf32> to vector<8x1xf32>
    %222 = arith.addf %218, %221 : vector<8x1xf32>
    %223 = vector.extract_strided_slice %201 {offsets = [40, 0], sizes = [8, 1], strides = [1, 1]} : vector<128x1xf32> to vector<8x1xf32>
    %224 = arith.addf %220, %223 : vector<8x1xf32>
    %225 = vector.extract_strided_slice %204 {offsets = [40, 0], sizes = [8, 1], strides = [1, 1]} : vector<128x1xf32> to vector<8x1xf32>
    %226 = arith.addf %222, %225 : vector<8x1xf32>
    %227 = vector.extract_strided_slice %201 {offsets = [48, 0], sizes = [8, 1], strides = [1, 1]} : vector<128x1xf32> to vector<8x1xf32>
    %228 = arith.addf %224, %227 : vector<8x1xf32>
    %229 = vector.extract_strided_slice %204 {offsets = [48, 0], sizes = [8, 1], strides = [1, 1]} : vector<128x1xf32> to vector<8x1xf32>
    %230 = arith.addf %226, %229 : vector<8x1xf32>
    %231 = vector.extract_strided_slice %201 {offsets = [56, 0], sizes = [8, 1], strides = [1, 1]} : vector<128x1xf32> to vector<8x1xf32>
    %232 = arith.addf %228, %231 : vector<8x1xf32>
    %233 = vector.extract_strided_slice %204 {offsets = [56, 0], sizes = [8, 1], strides = [1, 1]} : vector<128x1xf32> to vector<8x1xf32>
    %234 = arith.addf %230, %233 : vector<8x1xf32>
    %235 = vector.extract_strided_slice %201 {offsets = [64, 0], sizes = [8, 1], strides = [1, 1]} : vector<128x1xf32> to vector<8x1xf32>
    %236 = arith.addf %232, %235 : vector<8x1xf32>
    %237 = vector.extract_strided_slice %204 {offsets = [64, 0], sizes = [8, 1], strides = [1, 1]} : vector<128x1xf32> to vector<8x1xf32>
    %238 = arith.addf %234, %237 : vector<8x1xf32>
    %239 = vector.extract_strided_slice %201 {offsets = [72, 0], sizes = [8, 1], strides = [1, 1]} : vector<128x1xf32> to vector<8x1xf32>
    %240 = arith.addf %236, %239 : vector<8x1xf32>
    %241 = vector.extract_strided_slice %204 {offsets = [72, 0], sizes = [8, 1], strides = [1, 1]} : vector<128x1xf32> to vector<8x1xf32>
    %242 = arith.addf %238, %241 : vector<8x1xf32>
    %243 = vector.extract_strided_slice %201 {offsets = [80, 0], sizes = [8, 1], strides = [1, 1]} : vector<128x1xf32> to vector<8x1xf32>
    %244 = arith.addf %240, %243 : vector<8x1xf32>
    %245 = vector.extract_strided_slice %204 {offsets = [80, 0], sizes = [8, 1], strides = [1, 1]} : vector<128x1xf32> to vector<8x1xf32>
    %246 = arith.addf %242, %245 : vector<8x1xf32>
    %247 = vector.extract_strided_slice %201 {offsets = [88, 0], sizes = [8, 1], strides = [1, 1]} : vector<128x1xf32> to vector<8x1xf32>
    %248 = arith.addf %244, %247 : vector<8x1xf32>
    %249 = vector.extract_strided_slice %204 {offsets = [88, 0], sizes = [8, 1], strides = [1, 1]} : vector<128x1xf32> to vector<8x1xf32>
    %250 = arith.addf %246, %249 : vector<8x1xf32>
    %251 = vector.extract_strided_slice %201 {offsets = [96, 0], sizes = [8, 1], strides = [1, 1]} : vector<128x1xf32> to vector<8x1xf32>
    %252 = arith.addf %248, %251 : vector<8x1xf32>
    %253 = vector.extract_strided_slice %204 {offsets = [96, 0], sizes = [8, 1], strides = [1, 1]} : vector<128x1xf32> to vector<8x1xf32>
    %254 = arith.addf %250, %253 : vector<8x1xf32>
    %255 = vector.extract_strided_slice %201 {offsets = [104, 0], sizes = [8, 1], strides = [1, 1]} : vector<128x1xf32> to vector<8x1xf32>
    %256 = arith.addf %252, %255 : vector<8x1xf32>
    %257 = vector.extract_strided_slice %204 {offsets = [104, 0], sizes = [8, 1], strides = [1, 1]} : vector<128x1xf32> to vector<8x1xf32>
    %258 = arith.addf %254, %257 : vector<8x1xf32>
    %259 = vector.extract_strided_slice %201 {offsets = [112, 0], sizes = [8, 1], strides = [1, 1]} : vector<128x1xf32> to vector<8x1xf32>
    %260 = arith.addf %256, %259 : vector<8x1xf32>
    %261 = vector.extract_strided_slice %204 {offsets = [112, 0], sizes = [8, 1], strides = [1, 1]} : vector<128x1xf32> to vector<8x1xf32>
    %262 = arith.addf %258, %261 : vector<8x1xf32>
    %263 = vector.extract_strided_slice %201 {offsets = [120, 0], sizes = [8, 1], strides = [1, 1]} : vector<128x1xf32> to vector<8x1xf32>
    %264 = arith.addf %260, %263 : vector<8x1xf32>
    %265 = vector.extract_strided_slice %204 {offsets = [120, 0], sizes = [8, 1], strides = [1, 1]} : vector<128x1xf32> to vector<8x1xf32>
    %266 = arith.addf %262, %265 : vector<8x1xf32>
    %cst_49 = arith.constant 0.00223214296 : f32
    %267 = vector.broadcast %cst_49 : f32 to vector<8x1xf32>
    %268 = arith.mulf %264, %267 : vector<8x1xf32>
    %cst_50 = arith.constant 0.00223214296 : f32
    %269 = vector.broadcast %cst_50 : f32 to vector<8x1xf32>
    %270 = arith.mulf %266, %269 : vector<8x1xf32>
    %271 = arith.mulf %268, %268 : vector<8x1xf32>
    %272 = arith.subf %270, %271 : vector<8x1xf32>
    %cst_51 = arith.constant 0.000000e+00 : f32
    %273 = vector.broadcast %cst_51 : f32 to vector<8x1xf32>
    %274 = arith.maximumf %272, %273 : vector<8x1xf32>
    %cst_52 = arith.constant 9.99999974E-6 : f32
    %275 = vector.broadcast %cst_52 : f32 to vector<8x1xf32>
    %276 = arith.addf %274, %275 : vector<8x1xf32>
    %277 = math.rsqrt %276 : vector<8x1xf32>
    %278 = arith.mulf %198, %277 : vector<8x1xf32>
    %279 = arith.mulf %268, %278 : vector<8x1xf32>
    %280 = arith.subf %199, %279 : vector<8x1xf32>
    %281 = tpu.concatenate %278, %278, %278, %278, %278, %278, %278, %278, %278, %278, %278, %278, %278, %278, %278, %278 in 0 : vector<8x1xf32>, vector<8x1xf32>, vector<8x1xf32>, vector<8x1xf32>, vector<8x1xf32>, vector<8x1xf32>, vector<8x1xf32>, vector<8x1xf32>, vector<8x1xf32>, vector<8x1xf32>, vector<8x1xf32>, vector<8x1xf32>, vector<8x1xf32>, vector<8x1xf32>, vector<8x1xf32>, vector<8x1xf32> -> vector<128x1xf32>
    %282 = tpu.concatenate %280, %280, %280, %280, %280, %280, %280, %280, %280, %280, %280, %280, %280, %280, %280, %280 in 0 : vector<8x1xf32>, vector<8x1xf32>, vector<8x1xf32>, vector<8x1xf32>, vector<8x1xf32>, vector<8x1xf32>, vector<8x1xf32>, vector<8x1xf32>, vector<8x1xf32>, vector<8x1xf32>, vector<8x1xf32>, vector<8x1xf32>, vector<8x1xf32>, vector<8x1xf32>, vector<8x1xf32>, vector<8x1xf32> -> vector<128x1xf32>
    %283 = vector.broadcast %281 : vector<128x1xf32> to vector<128x28xf32>
    %284 = arith.mulf %197, %283 : vector<128x28xf32>
    %285 = vector.broadcast %282 : vector<128x1xf32> to vector<128x28xf32>
    %286 = arith.addf %284, %285 : vector<128x28xf32>
    %cst_53 = arith.constant 0.000000e+00 : f32
    %287 = vector.broadcast %cst_53 : f32 to vector<128x28xf32>
    %288 = arith.maximumf %286, %287 : vector<128x28xf32>
    %289 = vector.extract_strided_slice %288 {offsets = [0, 0], sizes = [8, 28], strides = [1, 1]} : vector<128x28xf32> to vector<8x28xf32>
    %290 = vector.extract_strided_slice %288 {offsets = [120, 0], sizes = [8, 28], strides = [1, 1]} : vector<128x28xf32> to vector<8x28xf32>
    %cst_54 = arith.constant 0.000000e+00 : f32
    %291 = vector.broadcast %cst_54 : f32 to vector<8x1xf32>
    %292 = vector.extract_strided_slice %290 {offsets = [0, 0], sizes = [8, 13], strides = [1, 1]} : vector<8x28xf32> to vector<8x13xf32>
    %293 = vector.extract_strided_slice %290 {offsets = [0, 14], sizes = [8, 13], strides = [1, 1]} : vector<8x28xf32> to vector<8x13xf32>
    %294 = tpu.concatenate %291, %292, %291, %293 in 1 : vector<8x1xf32>, vector<8x13xf32>, vector<8x1xf32>, vector<8x13xf32> -> vector<8x28xf32>
    %cst_55 = arith.constant 0.000000e+00 : f32
    %295 = vector.broadcast %cst_55 : f32 to vector<8x1xf32>
    %296 = vector.extract_strided_slice %289 {offsets = [0, 1], sizes = [8, 13], strides = [1, 1]} : vector<8x28xf32> to vector<8x13xf32>
    %297 = vector.extract_strided_slice %289 {offsets = [0, 15], sizes = [8, 13], strides = [1, 1]} : vector<8x28xf32> to vector<8x13xf32>
    %298 = tpu.concatenate %296, %295, %297, %295 in 1 : vector<8x13xf32>, vector<8x1xf32>, vector<8x13xf32>, vector<8x1xf32> -> vector<8x28xf32>
    %299 = tpu.concatenate %288, %294, %298 in 0 : vector<128x28xf32>, vector<8x28xf32>, vector<8x28xf32> -> vector<144x28xf32>
    %c0_56 = arith.constant 0 : index
    %c0_57 = arith.constant 0 : index
    %300 = vector.load %arg5[%c0_56, %c0_57] : memref<32x144xbf16, #tpu.memory_space<vmem>>, vector<32x144xbf16>
    %301 = arith.truncf %299 : vector<144x28xf32> to vector<144x28xbf16>
    %cst_58 = arith.constant dense<0.000000e+00> : vector<32x28xf32>
    %302 = tpu.matmul %300, %301, %cst_58 {dimension_numbers = #tpu.dot_dimension_numbers<[1], [0], [0], [1], [0, 0, 1, 1], [], []>} : vector<32x144xbf16>, vector<144x28xbf16>, vector<32x28xf32> -> vector<32x28xf32>
    %303 = math.tanh %302 : vector<32x28xf32>
    %c0_59 = arith.constant 0 : index
    %c0_60 = arith.constant 0 : index
    %304 = vector.load %arg7[%c0_59, %c0_60] : memref<32x28xf32, #tpu.memory_space<vmem>>, vector<32x28xf32>
    tpu.vector_store %arg7[%c0_59, %c0_60], %303 {strides = array<i32>} : memref<32x28xf32, #tpu.memory_space<vmem>>, vector<32x28xf32>,
    return
  }
}

</mosaic_0001>

<llo_original>
// kernel: generator_forward.1
$region0: #{generator_forward.1}
  #allocation0 [shape = 'u32[]', space=smem, size = 0x4, offset = 0x4, fixed_abs, tag = 'smem constant byte address 0x4 - core index']
  #allocation1 [shape = 'u32[144,128]{1,0:T(1,128)}', space=vmem, size = 0x12000, scoped, tag = 'internal scratch']
  %s0 = inlined_call_operand.vmem [shape: f32[3,28], index: 0, kind: input, shape index: {}]
  %s1 = inlined_call_operand.vmem [shape: f32[128,3], index: 1, kind: input, shape index: {}]
  %s2 = inlined_call_operand.vmem [shape: bf16[128,256], index: 2, kind: input, shape index: {}]
  %s3 = inlined_call_operand.vmem [shape: bf16[128,192], index: 3, kind: input, shape index: {}]
  %s4 = inlined_call_operand.vmem [shape: bf16[128,160], index: 4, kind: input, shape index: {}]
  %s5 = inlined_call_operand.vmem [shape: bf16[32,144], index: 5, kind: input, shape index: {}]
  %s6 = inlined_call_operand.vmem [shape: f32[240,1], index: 6, kind: input, shape index: {}]
  %s7 = inlined_call_operand.vmem [shape: f32[32,28], index: 7, kind: output, shape index: {}]
  %s8 = sld [smem:[#allocation0]]
  $region38: #{generator_forward.1} parent=0
    _
  %s10 = ssub.s32 1, %s8
  %s11 = scalar_select 0, %s10, %s8
  // Predicated region
  $region2: #{generator_forward.1} parent=0 // pred_check
    _
  $region3: #{generator_forward.1} parent=0 // pred_check_branch
    %13 = sbr.rel (0) target = $region5
  $region4: #{generator_forward.1} parent=0 // pred_region
    _
  $region5: #{generator_forward.1} parent=0 // pred_fallthru
    _
  // Predicated region
  $region6: #{generator_forward.1} parent=0 // pred_check
    _
  $region7: #{generator_forward.1} parent=0 // pred_check_branch
    %15 = sbr.rel (0) target = $region9
  $region8: #{generator_forward.1} parent=0 // pred_region
    _
  $region9: #{generator_forward.1} parent=0 // pred_fallthru
    _
  // Predicated region
  $region10: #{generator_forward.1} parent=0 // pred_check
    _
  $region11: #{generator_forward.1} parent=0 // pred_check_branch
    %17 = sbr.rel (0) target = $region13
  $region12: #{generator_forward.1} parent=0 // pred_region
    _
  $region13: #{generator_forward.1} parent=0 // pred_fallthru
    _
  // Predicated region
  $region14: #{generator_forward.1} parent=0 // pred_check
    _
  $region15: #{generator_forward.1} parent=0 // pred_check_branch
    %19 = sbr.rel (0) target = $region17
  $region16: #{generator_forward.1} parent=0 // pred_region
    _
  $region17: #{generator_forward.1} parent=0 // pred_fallthru
    _
  // Predicated region
  $region18: #{generator_forward.1} parent=0 // pred_check
    _
  $region19: #{generator_forward.1} parent=0 // pred_check_branch
    %21 = sbr.rel (0) target = $region21
  $region20: #{generator_forward.1} parent=0 // pred_region
    _
  $region21: #{generator_forward.1} parent=0 // pred_fallthru
    _
  // Predicated region
  $region22: #{generator_forward.1} parent=0 // pred_check
    _
  $region23: #{generator_forward.1} parent=0 // pred_check_branch
    %23 = sbr.rel (0) target = $region25
  $region24: #{generator_forward.1} parent=0 // pred_region
    _
  $region25: #{generator_forward.1} parent=0 // pred_fallthru
    _
  // Predicated region
  $region26: #{generator_forward.1} parent=0 // pred_check
    _
  $region27: #{generator_forward.1} parent=0 // pred_check_branch
    %25 = sbr.rel (0) target = $region29
  $region28: #{generator_forward.1} parent=0 // pred_region
    _
  $region29: #{generator_forward.1} parent=0 // pred_fallthru
    _
  %v27 = vld [vmem:[%s0] sm:$0x7]
  %v28 = vld [vmem:[%s1] sm:$0xff]
  %v29 = vld [vmem:[%s1 + $0x8] sm:$0xff]
  %v30 = vld [vmem:[%s1 + $0x10] sm:$0xff]
  %v31 = vld [vmem:[%s1 + $0x18] sm:$0xff]
  %v32 = vld [vmem:[%s1 + $0x20] sm:$0xff]
  %v33 = vld [vmem:[%s1 + $0x28] sm:$0xff]
  %v34 = vld [vmem:[%s1 + $0x30] sm:$0xff]
  %v35 = vld [vmem:[%s1 + $0x38] sm:$0xff]
  %v36 = vld [vmem:[%s1 + $0x40] sm:$0xff]
  %v37 = vld [vmem:[%s1 + $0x48] sm:$0xff]
  %v38 = vld [vmem:[%s1 + $0x50] sm:$0xff]
  %v39 = vld [vmem:[%s1 + $0x58] sm:$0xff]
  %v40 = vld [vmem:[%s1 + $0x60] sm:$0xff]
  %v41 = vld [vmem:[%s1 + $0x68] sm:$0xff]
  %v42 = vld [vmem:[%s1 + $0x70] sm:$0xff]
  %v43 = vld [vmem:[%s1 + $0x78] sm:$0xff]
  %45 = vset.pattern.permute.xlu0 0
  %46 = vperm.xlu0 %45, %v28
  %v47 = vpop.permute.xlu0 %46
  %50 = vset.pattern.permute.xlu0 0
  %51 = vperm.xlu0 %50, %v29
  %v52 = vpop.permute.xlu0 %51
  %55 = vset.pattern.permute.xlu0 0
  %56 = vperm.xlu0 %55, %v30
  %v57 = vpop.permute.xlu0 %56
  %60 = vset.pattern.permute.xlu0 0
  %61 = vperm.xlu0 %60, %v31
  %v62 = vpop.permute.xlu0 %61
  %65 = vset.pattern.permute.xlu0 0
  %66 = vperm.xlu0 %65, %v32
  %v67 = vpop.permute.xlu0 %66
  %70 = vset.pattern.permute.xlu0 0
  %71 = vperm.xlu0 %70, %v33
  %v72 = vpop.permute.xlu0 %71
  %75 = vset.pattern.permute.xlu0 0
  %76 = vperm.xlu0 %75, %v34
  %v77 = vpop.permute.xlu0 %76
  %80 = vset.pattern.permute.xlu0 0
  %81 = vperm.xlu0 %80, %v35
  %v82 = vpop.permute.xlu0 %81
  %85 = vset.pattern.permute.xlu0 0
  %86 = vperm.xlu0 %85, %v36
  %v87 = vpop.permute.xlu0 %86
  %90 = vset.pattern.permute.xlu0 0
  %91 = vperm.xlu0 %90, %v37
  %v92 = vpop.permute.xlu0 %91
  %95 = vset.pattern.permute.xlu0 0
  %96 = vperm.xlu0 %95, %v38
  %v97 = vpop.permute.xlu0 %96
  %100 = vset.pattern.permute.xlu0 0
  %101 = vperm.xlu0 %100, %v39
  %v102 = vpop.permute.xlu0 %101
  %105 = vset.pattern.permute.xlu0 0
  %106 = vperm.xlu0 %105, %v40
  %v107 = vpop.permute.xlu0 %106
  %110 = vset.pattern.permute.xlu0 0
  %111 = vperm.xlu0 %110, %v41
  %v112 = vpop.permute.xlu0 %111
  %115 = vset.pattern.permute.xlu0 0
  %116 = vperm.xlu0 %115, %v42
  %v117 = vpop.permute.xlu0 %116
  %120 = vset.pattern.permute.xlu0 0
  %121 = vperm.xlu0 %120, %v43
  %v122 = vpop.permute.xlu0 %121
  %v124 = vlaneseq
  %v125 = vshrl.u32 %v124, 7
  %v126 = vsub.s32 0, %v125
  %v127 = vrot.slane %v27, %v126
  %v128 = vmul.f32 %v47, %v127
  %v129 = vmul.f32 %v52, %v127
  %v130 = vmul.f32 %v57, %v127
  %v131 = vmul.f32 %v62, %v127
  %v132 = vmul.f32 %v67, %v127
  %v133 = vmul.f32 %v72, %v127
  %v134 = vmul.f32 %v77, %v127
  %v135 = vmul.f32 %v82, %v127
  %v136 = vmul.f32 %v87, %v127
  %v137 = vmul.f32 %v92, %v127
  %v138 = vmul.f32 %v97, %v127
  %v139 = vmul.f32 %v102, %v127
  %v140 = vmul.f32 %v107, %v127
  %v141 = vmul.f32 %v112, %v127
  %v142 = vmul.f32 %v117, %v127
  %v143 = vmul.f32 %v122, %v127
  %144 = vset.pattern.permute.xlu0 1
  %145 = vperm.xlu0 %144, %v28
  %v146 = vpop.permute.xlu0 %145
  %148 = vset.pattern.permute.xlu0 1
  %149 = vperm.xlu0 %148, %v29
  %v150 = vpop.permute.xlu0 %149
  %152 = vset.pattern.permute.xlu0 1
  %153 = vperm.xlu0 %152, %v30
  %v154 = vpop.permute.xlu0 %153
  %156 = vset.pattern.permute.xlu0 1
  %157 = vperm.xlu0 %156, %v31
  %v158 = vpop.permute.xlu0 %157
  %160 = vset.pattern.permute.xlu0 1
  %161 = vperm.xlu0 %160, %v32
  %v162 = vpop.permute.xlu0 %161
  %164 = vset.pattern.permute.xlu0 1
  %165 = vperm.xlu0 %164, %v33
  %v166 = vpop.permute.xlu0 %165
  %168 = vset.pattern.permute.xlu0 1
  %169 = vperm.xlu0 %168, %v34
  %v170 = vpop.permute.xlu0 %169
  %172 = vset.pattern.permute.xlu0 1
  %173 = vperm.xlu0 %172, %v35
  %v174 = vpop.permute.xlu0 %173
  %176 = vset.pattern.permute.xlu0 1
  %177 = vperm.xlu0 %176, %v36
  %v178 = vpop.permute.xlu0 %177
  %180 = vset.pattern.permute.xlu0 1
  %181 = vperm.xlu0 %180, %v37
  %v182 = vpop.permute.xlu0 %181
  %184 = vset.pattern.permute.xlu0 1
  %185 = vperm.xlu0 %184, %v38
  %v186 = vpop.permute.xlu0 %185
  %188 = vset.pattern.permute.xlu0 1
  %189 = vperm.xlu0 %188, %v39
  %v190 = vpop.permute.xlu0 %189
  %192 = vset.pattern.permute.xlu0 1
  %193 = vperm.xlu0 %192, %v40
  %v194 = vpop.permute.xlu0 %193
  %196 = vset.pattern.permute.xlu0 1
  %197 = vperm.xlu0 %196, %v41
  %v198 = vpop.permute.xlu0 %197
  %200 = vset.pattern.permute.xlu0 1
  %201 = vperm.xlu0 %200, %v42
  %v202 = vpop.permute.xlu0 %201
  %204 = vset.pattern.permute.xlu0 1
  %205 = vperm.xlu0 %204, %v43
  %v206 = vpop.permute.xlu0 %205
  %v208 = vlaneseq
  %v209 = vshrl.u32 %v208, 7
  %v210 = vsub.s32 1, %v209
  %v211 = vrot.slane %v27, %v210
  %v212 = vmul.f32 %v146, %v211
  %v213 = vmul.f32 %v150, %v211
  %v214 = vmul.f32 %v154, %v211
  %v215 = vmul.f32 %v158, %v211
  %v216 = vmul.f32 %v162, %v211
  %v217 = vmul.f32 %v166, %v211
  %v218 = vmul.f32 %v170, %v211
  %v219 = vmul.f32 %v174, %v211
  %v220 = vmul.f32 %v178, %v211
  %v221 = vmul.f32 %v182, %v211
  %v222 = vmul.f32 %v186, %v211
  %v223 = vmul.f32 %v190, %v211
  %v224 = vmul.f32 %v194, %v211
  %v225 = vmul.f32 %v198, %v211
  %v226 = vmul.f32 %v202, %v211
  %v227 = vmul.f32 %v206, %v211
  %v228 = vadd.f32 %v128, %v212
  %v229 = vadd.f32 %v129, %v213
  %v230 = vadd.f32 %v130, %v214
  %v231 = vadd.f32 %v131, %v215
  %v232 = vadd.f32 %v132, %v216
  %v233 = vadd.f32 %v133, %v217
  %v234 = vadd.f32 %v134, %v218
  %v235 = vadd.f32 %v135, %v219
  %v236 = vadd.f32 %v136, %v220
  %v237 = vadd.f32 %v137, %v221
  %v238 = vadd.f32 %v138, %v222
  %v239 = vadd.f32 %v139, %v223
  %v240 = vadd.f32 %v140, %v224
  %v241 = vadd.f32 %v141, %v225
  %v242 = vadd.f32 %v142, %v226
  %v243 = vadd.f32 %v143, %v227
  %244 = vset.pattern.permute.xlu0 2
  %245 = vperm.xlu0 %244, %v28
  %v246 = vpop.permute.xlu0 %245
  %248 = vset.pattern.permute.xlu0 2
  %249 = vperm.xlu0 %248, %v29
  %v250 = vpop.permute.xlu0 %249
  %252 = vset.pattern.permute.xlu0 2
  %253 = vperm.xlu0 %252, %v30
  %v254 = vpop.permute.xlu0 %253
  %256 = vset.pattern.permute.xlu0 2
  %257 = vperm.xlu0 %256, %v31
  %v258 = vpop.permute.xlu0 %257
  %260 = vset.pattern.permute.xlu0 2
  %261 = vperm.xlu0 %260, %v32
  %v262 = vpop.permute.xlu0 %261
  %264 = vset.pattern.permute.xlu0 2
  %265 = vperm.xlu0 %264, %v33
  %v266 = vpop.permute.xlu0 %265
  %268 = vset.pattern.permute.xlu0 2
  %269 = vperm.xlu0 %268, %v34
  %v270 = vpop.permute.xlu0 %269
  %272 = vset.pattern.permute.xlu0 2
  %273 = vperm.xlu0 %272, %v35
  %v274 = vpop.permute.xlu0 %273
  %276 = vset.pattern.permute.xlu0 2
  %277 = vperm.xlu0 %276, %v36
  %v278 = vpop.permute.xlu0 %277
  %280 = vset.pattern.permute.xlu0 2
  %281 = vperm.xlu0 %280, %v37
  %v282 = vpop.permute.xlu0 %281
  %284 = vset.pattern.permute.xlu0 2
  %285 = vperm.xlu0 %284, %v38
  %v286 = vpop.permute.xlu0 %285
  %288 = vset.pattern.permute.xlu0 2
  %289 = vperm.xlu0 %288, %v39
  %v290 = vpop.permute.xlu0 %289
  %292 = vset.pattern.permute.xlu0 2
  %293 = vperm.xlu0 %292, %v40
  %v294 = vpop.permute.xlu0 %293
  %296 = vset.pattern.permute.xlu0 2
  %297 = vperm.xlu0 %296, %v41
  %v298 = vpop.permute.xlu0 %297
  %300 = vset.pattern.permute.xlu0 2
  %301 = vperm.xlu0 %300, %v42
  %v302 = vpop.permute.xlu0 %301
  %304 = vset.pattern.permute.xlu0 2
  %305 = vperm.xlu0 %304, %v43
  %v306 = vpop.permute.xlu0 %305
  %v308 = vlaneseq
  %v309 = vshrl.u32 %v308, 7
  %v310 = vsub.s32 2, %v309
  %v311 = vrot.slane %v27, %v310
  %v312 = vmul.f32 %v246, %v311
  %v313 = vmul.f32 %v250, %v311
  %v314 = vmul.f32 %v254, %v311
  %v315 = vmul.f32 %v258, %v311
  %v316 = vmul.f32 %v262, %v311
  %v317 = vmul.f32 %v266, %v311
  %v318 = vmul.f32 %v270, %v311
  %v319 = vmul.f32 %v274, %v311
  %v320 = vmul.f32 %v278, %v311
  %v321 = vmul.f32 %v282, %v311
  %v322 = vmul.f32 %v286, %v311
  %v323 = vmul.f32 %v290, %v311
  %v324 = vmul.f32 %v294, %v311
  %v325 = vmul.f32 %v298, %v311
  %v326 = vmul.f32 %v302, %v311
  %v327 = vmul.f32 %v306, %v311
  %v328 = vadd.f32 %v228, %v312
  %v329 = vadd.f32 %v229, %v313
  %v330 = vadd.f32 %v230, %v314
  %v331 = vadd.f32 %v231, %v315
  %v332 = vadd.f32 %v232, %v316
  %v333 = vadd.f32 %v233, %v317
  %v334 = vadd.f32 %v234, %v318
  %v335 = vadd.f32 %v235, %v319
  %v336 = vadd.f32 %v236, %v320
  %v337 = vadd.f32 %v237, %v321
  %v338 = vadd.f32 %v238, %v322
  %v339 = vadd.f32 %v239, %v323
  %v340 = vadd.f32 %v240, %v324
  %v341 = vadd.f32 %v241, %v325
  %v342 = vadd.f32 %v242, %v326
  %v343 = vadd.f32 %v243, %v327
  %v344 = vld [vmem:[%s6] sm:$0xff]
  %v345 = vld [vmem:[%s6 + $0x8] sm:$0xff]
  %v346 = vld [vmem:[%s6 + $0x10] sm:$0xff]
  %v347 = vld [vmem:[%s6 + $0x18] sm:$0xff]
  %v348 = vld [vmem:[%s6 + $0x20] sm:$0xff]
  %v349 = vld [vmem:[%s6 + $0x28] sm:$0xff]
  %v350 = vld [vmem:[%s6 + $0x30] sm:$0xff]
  %v351 = vld [vmem:[%s6 + $0x38] sm:$0xff]
  %v352 = vld [vmem:[%s6 + $0x78] sm:$0xff]
  %v353 = vld [vmem:[%s6 + $0x80] sm:$0xff]
  %v354 = vld [vmem:[%s6 + $0x88] sm:$0xff]
  %v355 = vld [vmem:[%s6 + $0x90] sm:$0xff]
  %v356 = vld [vmem:[%s6 + $0x98] sm:$0xff]
  %v357 = vld [vmem:[%s6 + $0xa0] sm:$0xff]
  %v358 = vld [vmem:[%s6 + $0xa8] sm:$0xff]
  %v359 = vld [vmem:[%s6 + $0xb0] sm:$0xff]
  %vm360 = vcmask 228352
  %v361 = vsel %vm360, %v328, 0.0
  %362 = vadd.xlane.f32.xlu0 %v361
  %v363 = vpop.xlane.xlu0 %362
  %v364 = vsel %vm360, %v329, 0.0
  %365 = vadd.xlane.f32.xlu0 %v364
  %v366 = vpop.xlane.xlu0 %365
  %v367 = vsel %vm360, %v330, 0.0
  %368 = vadd.xlane.f32.xlu0 %v367
  %v369 = vpop.xlane.xlu0 %368
  %v370 = vsel %vm360, %v331, 0.0
  %371 = vadd.xlane.f32.xlu0 %v370
  %v372 = vpop.xlane.xlu0 %371
  %v373 = vsel %vm360, %v332, 0.0
  %374 = vadd.xlane.f32.xlu0 %v373
  %v375 = vpop.xlane.xlu0 %374
  %v376 = vsel %vm360, %v333, 0.0
  %377 = vadd.xlane.f32.xlu0 %v376
  %v378 = vpop.xlane.xlu0 %377
  %v379 = vsel %vm360, %v334, 0.0
  %380 = vadd.xlane.f32.xlu0 %v379
  %v381 = vpop.xlane.xlu0 %380
  %v382 = vsel %vm360, %v335, 0.0
  %383 = vadd.xlane.f32.xlu0 %v382
  %v384 = vpop.xlane.xlu0 %383
  %v385 = vsel %vm360, %v336, 0.0
  %386 = vadd.xlane.f32.xlu0 %v385
  %v387 = vpop.xlane.xlu0 %386
  %v388 = vsel %vm360, %v337, 0.0
  %389 = vadd.xlane.f32.xlu0 %v388
  %v390 = vpop.xlane.xlu0 %389
  %v391 = vsel %vm360, %v338, 0.0
  %392 = vadd.xlane.f32.xlu0 %v391
  %v393 = vpop.xlane.xlu0 %392
  %v394 = vsel %vm360, %v339, 0.0
  %395 = vadd.xlane.f32.xlu0 %v394
  %v396 = vpop.xlane.xlu0 %395
  %v397 = vsel %vm360, %v340, 0.0
  %398 = vadd.xlane.f32.xlu0 %v397
  %v399 = vpop.xlane.xlu0 %398
  %v400 = vsel %vm360, %v341, 0.0
  %401 = vadd.xlane.f32.xlu0 %v400
  %v402 = vpop.xlane.xlu0 %401
  %v403 = vsel %vm360, %v342, 0.0
  %404 = vadd.xlane.f32.xlu0 %v403
  %v405 = vpop.xlane.xlu0 %404
  %v406 = vsel %vm360, %v343, 0.0
  %407 = vadd.xlane.f32.xlu0 %v406
  %v408 = vpop.xlane.xlu0 %407
  %v409 = vmul.f32 %v328, %v328
  %v410 = vmul.f32 %v329, %v329
  %v411 = vmul.f32 %v330, %v330
  %v412 = vmul.f32 %v331, %v331
  %v413 = vmul.f32 %v332, %v332
  %v414 = vmul.f32 %v333, %v333
  %v415 = vmul.f32 %v334, %v334
  %v416 = vmul.f32 %v335, %v335
  %v417 = vmul.f32 %v336, %v336
  %v418 = vmul.f32 %v337, %v337
  %v419 = vmul.f32 %v338, %v338
  %v420 = vmul.f32 %v339, %v339
  %v421 = vmul.f32 %v340, %v340
  %v422 = vmul.f32 %v341, %v341
  %v423 = vmul.f32 %v342, %v342
  %v424 = vmul.f32 %v343, %v343
  %v425 = vsel %vm360, %v409, 0.0
  %426 = vadd.xlane.f32.xlu0 %v425
  %v427 = vpop.xlane.xlu0 %426
  %v428 = vsel %vm360, %v410, 0.0
  %429 = vadd.xlane.f32.xlu0 %v428
  %v430 = vpop.xlane.xlu0 %429
  %v431 = vsel %vm360, %v411, 0.0
  %432 = vadd.xlane.f32.xlu0 %v431
  %v433 = vpop.xlane.xlu0 %432
  %v434 = vsel %vm360, %v412, 0.0
  %435 = vadd.xlane.f32.xlu0 %v434
  %v436 = vpop.xlane.xlu0 %435
  %v437 = vsel %vm360, %v413, 0.0
  %438 = vadd.xlane.f32.xlu0 %v437
  %v439 = vpop.xlane.xlu0 %438
  %v440 = vsel %vm360, %v414, 0.0
  %441 = vadd.xlane.f32.xlu0 %v440
  %v442 = vpop.xlane.xlu0 %441
  %v443 = vsel %vm360, %v415, 0.0
  %444 = vadd.xlane.f32.xlu0 %v443
  %v445 = vpop.xlane.xlu0 %444
  %v446 = vsel %vm360, %v416, 0.0
  %447 = vadd.xlane.f32.xlu0 %v446
  %v448 = vpop.xlane.xlu0 %447
  %v449 = vsel %vm360, %v417, 0.0
  %450 = vadd.xlane.f32.xlu0 %v449
  %v451 = vpop.xlane.xlu0 %450
  %v452 = vsel %vm360, %v418, 0.0
  %453 = vadd.xlane.f32.xlu0 %v452
  %v454 = vpop.xlane.xlu0 %453
  %v455 = vsel %vm360, %v419, 0.0
  %456 = vadd.xlane.f32.xlu0 %v455
  %v457 = vpop.xlane.xlu0 %456
  %v458 = vsel %vm360, %v420, 0.0
  %459 = vadd.xlane.f32.xlu0 %v458
  %v460 = vpop.xlane.xlu0 %459
  %v461 = vsel %vm360, %v421, 0.0
  %462 = vadd.xlane.f32.xlu0 %v461
  %v463 = vpop.xlane.xlu0 %462
  %v464 = vsel %vm360, %v422, 0.0
  %465 = vadd.xlane.f32.xlu0 %v464
  %v466 = vpop.xlane.xlu0 %465
  %v467 = vsel %vm360, %v423, 0.0
  %468 = vadd.xlane.f32.xlu0 %v467
  %v469 = vpop.xlane.xlu0 %468
  %v470 = vsel %vm360, %v424, 0.0
  %471 = vadd.xlane.f32.xlu0 %v470
  %v472 = vpop.xlane.xlu0 %471
  %v473 = vadd.f32 %v363, %v387
  %v474 = vadd.f32 %v366, %v390
  %v475 = vadd.f32 %v369, %v393
  %v476 = vadd.f32 %v372, %v396
  %v477 = vadd.f32 %v375, %v399
  %v478 = vadd.f32 %v378, %v402
  %v479 = vadd.f32 %v381, %v405
  %v480 = vadd.f32 %v384, %v408
  %v481 = vadd.f32 %v427, %v451
  %v482 = vadd.f32 %v430, %v454
  %v483 = vadd.f32 %v433, %v457
  %v484 = vadd.f32 %v436, %v460
  %v485 = vadd.f32 %v439, %v463
  %v486 = vadd.f32 %v442, %v466
  %v487 = vadd.f32 %v445, %v469
  %v488 = vadd.f32 %v448, %v472
  %v489 = vmul.f32 %v473, 0.017857144
  %v490 = vmul.f32 %v474, 0.017857144
  %v491 = vmul.f32 %v475, 0.017857144
  %v492 = vmul.f32 %v476, 0.017857144
  %v493 = vmul.f32 %v477, 0.017857144
  %v494 = vmul.f32 %v478, 0.017857144
  %v495 = vmul.f32 %v479, 0.017857144
  %v496 = vmul.f32 %v480, 0.017857144
  %v497 = vmul.f32 %v481, 0.017857144
  %v498 = vmul.f32 %v482, 0.017857144
  %v499 = vmul.f32 %v483, 0.017857144
  %v500 = vmul.f32 %v484, 0.017857144
  %v501 = vmul.f32 %v485, 0.017857144
  %v502 = vmul.f32 %v486, 0.017857144
  %v503 = vmul.f32 %v487, 0.017857144
  %v504 = vmul.f32 %v488, 0.017857144
  %v505 = vmul.f32 %v489, %v489
  %v506 = vmul.f32 %v490, %v490
  %v507 = vmul.f32 %v491, %v491
  %v508 = vmul.f32 %v492, %v492
  %v509 = vmul.f32 %v493, %v493
  %v510 = vmul.f32 %v494, %v494
  %v511 = vmul.f32 %v495, %v495
  %v512 = vmul.f32 %v496, %v496
  %v513 = vsub.f32 %v497, %v505
  %v514 = vsub.f32 %v498, %v506
  %v515 = vsub.f32 %v499, %v507
  %v516 = vsub.f32 %v500, %v508
  %v517 = vsub.f32 %v501, %v509
  %v518 = vsub.f32 %v502, %v510
  %v519 = vsub.f32 %v503, %v511
  %v520 = vsub.f32 %v504, %v512
  %v521 = vmax.f32 %v513, 0.0
  %v522 = vmax.f32 %v514, 0.0
  %v523 = vmax.f32 %v515, 0.0
  %v524 = vmax.f32 %v516, 0.0
  %v525 = vmax.f32 %v517, 0.0
  %v526 = vmax.f32 %v518, 0.0
  %v527 = vmax.f32 %v519, 0.0
  %v528 = vmax.f32 %v520, 0.0
  %v529 = vadd.f32 %v521, 1e-05
  %v530 = vadd.f32 %v522, 1e-05
  %v531 = vadd.f32 %v523, 1e-05
  %v532 = vadd.f32 %v524, 1e-05
  %v533 = vadd.f32 %v525, 1e-05
  %v534 = vadd.f32 %v526, 1e-05
  %v535 = vadd.f32 %v527, 1e-05
  %v536 = vadd.f32 %v528, 1e-05
  %v537 = vrsqrt.pop %v529
  %v538 = vrsqrt.pop %v530
  %v539 = vrsqrt.pop %v531
  %v540 = vrsqrt.pop %v532
  %v541 = vrsqrt.pop %v533
  %v542 = vrsqrt.pop %v534
  %v543 = vrsqrt.pop %v535
  %v544 = vrsqrt.pop %v536
  %v545 = vmul.f32 %v344, %v537
  %v546 = vmul.f32 %v345, %v538
  %v547 = vmul.f32 %v346, %v539
  %v548 = vmul.f32 %v347, %v540
  %v549 = vmul.f32 %v348, %v541
  %v550 = vmul.f32 %v349, %v542
  %v551 = vmul.f32 %v350, %v543
  %v552 = vmul.f32 %v351, %v544
  %v553 = vmul.f32 %v489, %v545
  %v554 = vmul.f32 %v490, %v546
  %v555 = vmul.f32 %v491, %v547
  %v556 = vmul.f32 %v492, %v548
  %v557 = vmul.f32 %v493, %v549
  %v558 = vmul.f32 %v494, %v550
  %v559 = vmul.f32 %v495, %v551
  %v560 = vmul.f32 %v496, %v552
  %v561 = vsub.f32 %v352, %v553
  %v562 = vsub.f32 %v353, %v554
  %v563 = vsub.f32 %v354, %v555
  %v564 = vsub.f32 %v355, %v556
  %v565 = vsub.f32 %v356, %v557
  %v566 = vsub.f32 %v357, %v558
  %v567 = vsub.f32 %v358, %v559
  %v568 = vsub.f32 %v359, %v560
  %570 = vset.pattern.permute.xlu0 0
  %571 = vperm.xlu0 %570, %v545
  %v572 = vpop.permute.xlu0 %571
  %575 = vset.pattern.permute.xlu0 0
  %576 = vperm.xlu0 %575, %v546
  %v577 = vpop.permute.xlu0 %576
  %580 = vset.pattern.permute.xlu0 0
  %581 = vperm.xlu0 %580, %v547
  %v582 = vpop.permute.xlu0 %581
  %585 = vset.pattern.permute.xlu0 0
  %586 = vperm.xlu0 %585, %v548
  %v587 = vpop.permute.xlu0 %586
  %590 = vset.pattern.permute.xlu0 0
  %591 = vperm.xlu0 %590, %v549
  %v592 = vpop.permute.xlu0 %591
  %595 = vset.pattern.permute.xlu0 0
  %596 = vperm.xlu0 %595, %v550
  %v597 = vpop.permute.xlu0 %596
  %600 = vset.pattern.permute.xlu0 0
  %601 = vperm.xlu0 %600, %v551
  %v602 = vpop.permute.xlu0 %601
  %605 = vset.pattern.permute.xlu0 0
  %606 = vperm.xlu0 %605, %v552
  %v607 = vpop.permute.xlu0 %606
  %v609 = vmul.f32 %v328, %v572
  %v610 = vmul.f32 %v329, %v577
  %v611 = vmul.f32 %v330, %v582
  %v612 = vmul.f32 %v331, %v587
  %v613 = vmul.f32 %v332, %v592
  %v614 = vmul.f32 %v333, %v597
  %v615 = vmul.f32 %v334, %v602
  %v616 = vmul.f32 %v335, %v607
  %v617 = vmul.f32 %v336, %v572
  %v618 = vmul.f32 %v337, %v577
  %v619 = vmul.f32 %v338, %v582
  %v620 = vmul.f32 %v339, %v587
  %v621 = vmul.f32 %v340, %v592
  %v622 = vmul.f32 %v341, %v597
  %v623 = vmul.f32 %v342, %v602
  %v624 = vmul.f32 %v343, %v607
  %626 = vset.pattern.permute.xlu0 0
  %627 = vperm.xlu0 %626, %v561
  %v628 = vpop.permute.xlu0 %627
  %631 = vset.pattern.permute.xlu0 0
  %632 = vperm.xlu0 %631, %v562
  %v633 = vpop.permute.xlu0 %632
  %636 = vset.pattern.permute.xlu0 0
  %637 = vperm.xlu0 %636, %v563
  %v638 = vpop.permute.xlu0 %637
  %641 = vset.pattern.permute.xlu0 0
  %642 = vperm.xlu0 %641, %v564
  %v643 = vpop.permute.xlu0 %642
  %646 = vset.pattern.permute.xlu0 0
  %647 = vperm.xlu0 %646, %v565
  %v648 = vpop.permute.xlu0 %647
  %651 = vset.pattern.permute.xlu0 0
  %652 = vperm.xlu0 %651, %v566
  %v653 = vpop.permute.xlu0 %652
  %656 = vset.pattern.permute.xlu0 0
  %657 = vperm.xlu0 %656, %v567
  %v658 = vpop.permute.xlu0 %657
  %661 = vset.pattern.permute.xlu0 0
  %662 = vperm.xlu0 %661, %v568
  %v663 = vpop.permute.xlu0 %662
  %v665 = vadd.f32 %v609, %v628
  %v666 = vadd.f32 %v610, %v633
  %v667 = vadd.f32 %v611, %v638
  %v668 = vadd.f32 %v612, %v643
  %v669 = vadd.f32 %v613, %v648
  %v670 = vadd.f32 %v614, %v653
  %v671 = vadd.f32 %v615, %v658
  %v672 = vadd.f32 %v616, %v663
  %v673 = vadd.f32 %v617, %v628
  %v674 = vadd.f32 %v618, %v633
  %v675 = vadd.f32 %v619, %v638
  %v676 = vadd.f32 %v620, %v643
  %v677 = vadd.f32 %v621, %v648
  %v678 = vadd.f32 %v622, %v653
  %v679 = vadd.f32 %v623, %v658
  %v680 = vadd.f32 %v624, %v663
  %v681 = vmax.f32 %v665, 0.0
  %v682 = vmax.f32 %v666, 0.0
  %v683 = vmax.f32 %v667, 0.0
  %v684 = vmax.f32 %v668, 0.0
  %v685 = vmax.f32 %v669, 0.0
  %v686 = vmax.f32 %v670, 0.0
  %v687 = vmax.f32 %v671, 0.0
  %v688 = vmax.f32 %v672, 0.0
  %v689 = vmax.f32 %v673, 0.0
  %v690 = vmax.f32 %v674, 0.0
  %v691 = vmax.f32 %v675, 0.0
  %v692 = vmax.f32 %v676, 0.0
  %v693 = vmax.f32 %v677, 0.0
  %v694 = vmax.f32 %v678, 0.0
  %v695 = vmax.f32 %v679, 0.0
  %v696 = vmax.f32 %v680, 0.0
  %705 = vrot.lane.b32.xlu0 %v689, 1
  %v706 = vpop.permute.xlu0 %705
  %707 = vrot.lane.b32.xlu0 %v690, 1
  %v708 = vpop.permute.xlu0 %707
  %709 = vrot.lane.b32.xlu0 %v691, 1
  %v710 = vpop.permute.xlu0 %709
  %711 = vrot.lane.b32.xlu0 %v692, 1
  %v712 = vpop.permute.xlu0 %711
  %713 = vrot.lane.b32.xlu0 %v693, 1
  %v714 = vpop.permute.xlu0 %713
  %715 = vrot.lane.b32.xlu0 %v694, 1
  %v716 = vpop.permute.xlu0 %715
  %717 = vrot.lane.b32.xlu0 %v695, 1
  %v718 = vpop.permute.xlu0 %717
  %719 = vrot.lane.b32.xlu0 %v696, 1
  %v720 = vpop.permute.xlu0 %719
  %vm729 = vcmask 7168
  %v730 = vsel %vm729, 0.0, %v706
  %v731 = vsel %vm729, 0.0, %v708
  %v732 = vsel %vm729, 0.0, %v710
  %v733 = vsel %vm729, 0.0, %v712
  %v734 = vsel %vm729, 0.0, %v714
  %v735 = vsel %vm729, 0.0, %v716
  %v736 = vsel %vm729, 0.0, %v718
  %v737 = vsel %vm729, 0.0, %v720
  %vm738 = vcmask 113664
  %v739 = vsel %vm738, %v730, 0.0
  %v740 = vsel %vm738, %v731, 0.0
  %v741 = vsel %vm738, %v732, 0.0
  %v742 = vsel %vm738, %v733, 0.0
  %v743 = vsel %vm738, %v734, 0.0
  %v744 = vsel %vm738, %v735, 0.0
  %v745 = vsel %vm738, %v736, 0.0
  %v746 = vsel %vm738, %v737, 0.0
  %vm747 = vcmask 121856
  %v748 = vsel %vm747, %v739, %v706
  %v749 = vsel %vm747, %v740, %v708
  %v750 = vsel %vm747, %v741, %v710
  %v751 = vsel %vm747, %v742, %v712
  %v752 = vsel %vm747, %v743, %v714
  %v753 = vsel %vm747, %v744, %v716
  %v754 = vsel %vm747, %v745, %v718
  %v755 = vsel %vm747, %v746, %v720
  %764 = vrot.lane.b32.xlu0 %v681, 127
  %v765 = vpop.permute.xlu0 %764
  %766 = vrot.lane.b32.xlu0 %v682, 127
  %v767 = vpop.permute.xlu0 %766
  %768 = vrot.lane.b32.xlu0 %v683, 127
  %v769 = vpop.permute.xlu0 %768
  %770 = vrot.lane.b32.xlu0 %v684, 127
  %v771 = vpop.permute.xlu0 %770
  %772 = vrot.lane.b32.xlu0 %v685, 127
  %v773 = vpop.permute.xlu0 %772
  %774 = vrot.lane.b32.xlu0 %v686, 127
  %v775 = vpop.permute.xlu0 %774
  %776 = vrot.lane.b32.xlu0 %v687, 127
  %v777 = vpop.permute.xlu0 %776
  %778 = vrot.lane.b32.xlu0 %v688, 127
  %v779 = vpop.permute.xlu0 %778
  %vm788 = vcmask 105472
  %v789 = vsel %vm788, %v765, 0.0
  %v790 = vsel %vm788, %v767, 0.0
  %v791 = vsel %vm788, %v769, 0.0
  %v792 = vsel %vm788, %v771, 0.0
  %v793 = vsel %vm788, %v773, 0.0
  %v794 = vsel %vm788, %v775, 0.0
  %v795 = vsel %vm788, %v777, 0.0
  %v796 = vsel %vm788, %v779, 0.0
  %v797 = vsel %vm738, %v789, %v765
  %v798 = vsel %vm738, %v790, %v767
  %v799 = vsel %vm738, %v791, %v769
  %v800 = vsel %vm738, %v792, %v771
  %v801 = vsel %vm738, %v793, %v773
  %v802 = vsel %vm738, %v794, %v775
  %v803 = vsel %vm738, %v795, %v777
  %v804 = vsel %vm738, %v796, %v779
  %vm805 = vcmask 220160
  %v806 = vsel %vm805, %v797, 0.0
  %v807 = vsel %vm805, %v798, 0.0
  %v808 = vsel %vm805, %v799, 0.0
  %v809 = vsel %vm805, %v800, 0.0
  %v810 = vsel %vm805, %v801, 0.0
  %v811 = vsel %vm805, %v802, 0.0
  %v812 = vsel %vm805, %v803, 0.0
  %v813 = vsel %vm805, %v804, 0.0
  %v814 = vld [vmem:[%s2] sm:$0xff]
  %v815 = vld [vmem:[%s2 + $0x8] sm:$0xff]
  %v816 = vld [vmem:[%s2 + $0x10] sm:$0xff]
  %v817 = vld [vmem:[%s2 + $0x18] sm:$0xff]
  %v818 = vld [vmem:[%s2 + $0x20] sm:$0xff]
  %v819 = vld [vmem:[%s2 + $0x28] sm:$0xff]
  %v820 = vld [vmem:[%s2 + $0x30] sm:$0xff]
  %v821 = vld [vmem:[%s2 + $0x38] sm:$0xff]
  %v822 = vld [vmem:[%s2 + $0x40] sm:$0xff]
  %v823 = vld [vmem:[%s2 + $0x48] sm:$0xff]
  %v824 = vld [vmem:[%s2 + $0x50] sm:$0xff]
  %v825 = vld [vmem:[%s2 + $0x58] sm:$0xff]
  %v826 = vld [vmem:[%s2 + $0x60] sm:$0xff]
  %v827 = vld [vmem:[%s2 + $0x68] sm:$0xff]
  %v828 = vld [vmem:[%s2 + $0x70] sm:$0xff]
  %v829 = vld [vmem:[%s2 + $0x78] sm:$0xff]
  %v830 = vpack.c.bf16 %v682, %v681
  %v831 = vpack.c.bf16 %v684, %v683
  %v832 = vpack.c.bf16 %v686, %v685
  %v833 = vpack.c.bf16 %v688, %v687
  %v834 = vpack.c.bf16 %v690, %v689
  %v835 = vpack.c.bf16 %v692, %v691
  %v836 = vpack.c.bf16 %v694, %v693
  %v837 = vpack.c.bf16 %v696, %v695
  %v838 = vpack.c.bf16 %v749, %v748
  %v839 = vpack.c.bf16 %v751, %v750
  %v840 = vpack.c.bf16 %v753, %v752
  %v841 = vpack.c.bf16 %v755, %v754
  %v842 = vpack.c.bf16 %v807, %v806
  %v843 = vpack.c.bf16 %v809, %v808
  %v844 = vpack.c.bf16 %v811, %v810
  %v845 = vpack.c.bf16 %v813, %v812
  %v862 = vunpack.c.l.b16 %v814
  %v863 = vunpack.c.h.b16 %v814
  %v864 = vunpack.c.l.b16 %v815
  %v865 = vunpack.c.h.b16 %v815
  %v866 = vunpack.c.l.b16 %v816
  %v867 = vunpack.c.h.b16 %v816
  %v868 = vunpack.c.l.b16 %v817
  %v869 = vunpack.c.h.b16 %v817
  %v870 = vunpack.c.l.b16 %v818
  %v871 = vunpack.c.h.b16 %v818
  %v872 = vunpack.c.l.b16 %v819
  %v873 = vunpack.c.h.b16 %v819
  %v874 = vunpack.c.l.b16 %v820
  %v875 = vunpack.c.h.b16 %v820
  %v876 = vunpack.c.l.b16 %v821
  %v877 = vunpack.c.h.b16 %v821
  %v878 = vunpack.c.l.b16 %v822
  %v879 = vunpack.c.h.b16 %v822
  %v880 = vunpack.c.l.b16 %v823
  %v881 = vunpack.c.h.b16 %v823
  %v882 = vunpack.c.l.b16 %v824
  %v883 = vunpack.c.h.b16 %v824
  %v884 = vunpack.c.l.b16 %v825
  %v885 = vunpack.c.h.b16 %v825
  %v886 = vunpack.c.l.b16 %v826
  %v887 = vunpack.c.h.b16 %v826
  %v888 = vunpack.c.l.b16 %v827
  %v889 = vunpack.c.h.b16 %v827
  %v890 = vunpack.c.l.b16 %v828
  %v891 = vunpack.c.h.b16 %v828
  %v892 = vunpack.c.l.b16 %v829
  %v893 = vunpack.c.h.b16 %v829
  %v894 = vpack.c.b16 %v864, %v862
  %v895 = vpack.c.b16 %v865, %v863
  %v896 = vpack.c.b16 %v868, %v866
  %v897 = vpack.c.b16 %v869, %v867
  %v898 = vpack.c.b16 %v872, %v870
  %v899 = vpack.c.b16 %v873, %v871
  %v900 = vpack.c.b16 %v876, %v874
  %v901 = vpack.c.b16 %v877, %v875
  %v902 = vpack.c.b16 %v880, %v878
  %v903 = vpack.c.b16 %v881, %v879
  %v904 = vpack.c.b16 %v884, %v882
  %v905 = vpack.c.b16 %v885, %v883
  %v906 = vpack.c.b16 %v888, %v886
  %v907 = vpack.c.b16 %v889, %v887
  %v908 = vpack.c.b16 %v892, %v890
  %v909 = vpack.c.b16 %v893, %v891
  %926 = vmatprep.subr.bf16.mxu0 0
  %927 = vmatpush1.bf16.msra.mxu0 %v837
  %928 = vmatprep.subr.bf16.mxu0 0
  %929 = vmatpush1.bf16.msra.mxu0 %v836
  %930 = vmatprep.subr.bf16.mxu0 0
  %931 = vmatpush1.bf16.msra.mxu0 %v835
  %932 = vmatprep.subr.bf16.mxu0 0
  %933 = vmatpush1.bf16.msra.mxu0 %v834
  %934 = vmatprep.subr.bf16.mxu0 0
  %935 = vmatpush1.bf16.msra.mxu0 %v833
  %936 = vmatprep.subr.bf16.mxu0 0
  %937 = vmatpush1.bf16.msra.mxu0 %v832
  %938 = vmatprep.subr.bf16.mxu0 0
  %939 = vmatpush1.bf16.msra.mxu0 %v831
  %940 = vmatprep.subr.bf16.mxu0 0
  %941 = vmatpush1.bf16.msra.mxu0 %v830
  %942 = vmatprep.subr.bf16.mxu0 0
  %943 = vmatpush2.bf16.msra.mxu0 %v845
  %944 = vmatprep.subr.bf16.mxu0 0
  %945 = vmatpush2.bf16.msra.mxu0 %v844
  %946 = vmatprep.subr.bf16.mxu0 0
  %947 = vmatpush2.bf16.msra.mxu0 %v843
  %948 = vmatprep.subr.bf16.mxu0 0
  %949 = vmatpush2.bf16.msra.mxu0 %v842
  %950 = vmatprep.subr.bf16.mxu0 0
  %951 = vmatpush2.bf16.msra.mxu0 %v841
  %952 = vmatprep.subr.bf16.mxu0 0
  %953 = vmatpush2.bf16.msra.mxu0 %v840
  %954 = vmatprep.subr.bf16.mxu0 0
  %955 = vmatpush2.bf16.msra.mxu0 %v839
  %956 = vmatprep.subr.bf16.mxu0 0
  %957 = vmatpush2.bf16.msra.mxu0 %v838
  %958 = vmatprep.mubr.bf16.mxu0 %v895
  %959 = vmatmul.mubr.bf16.gmra.mxu0 %v894
  %v960 = vpop.f32.mrf.mxu0
  %v961 = vadd.f32 0.0, %v960
  %v962 = vpop.f32.mrf.mxu0
  %v963 = vpop.f32.mrf.mxu0
  %v964 = vadd.f32 0.0, %v963
  %v965 = vpop.f32.mrf.mxu0
  %966 = vmatprep.mubr.bf16.mxu0 %v897
  %967 = vmatmul.mubr.bf16.gmra.mxu0 %v896
  %v968 = vpop.f32.mrf.mxu0
  %v969 = vadd.f32 0.0, %v968
  %v970 = vpop.f32.mrf.mxu0
  %v971 = vpop.f32.mrf.mxu0
  %v972 = vadd.f32 0.0, %v971
  %v973 = vpop.f32.mrf.mxu0
  %974 = vmatprep.mubr.bf16.mxu0 %v899
  %975 = vmatmul.mubr.bf16.gmra.mxu0 %v898
  %v976 = vpop.f32.mrf.mxu0
  %v977 = vadd.f32 0.0, %v976
  %v978 = vpop.f32.mrf.mxu0
  %v979 = vpop.f32.mrf.mxu0
  %v980 = vadd.f32 0.0, %v979
  %v981 = vpop.f32.mrf.mxu0
  %982 = vmatprep.mubr.bf16.mxu0 %v901
  %983 = vmatmul.mubr.bf16.gmra.mxu0 %v900
  %v984 = vpop.f32.mrf.mxu0
  %v985 = vadd.f32 0.0, %v984
  %v986 = vpop.f32.mrf.mxu0
  %v987 = vpop.f32.mrf.mxu0
  %v988 = vadd.f32 0.0, %v987
  %v989 = vpop.f32.mrf.mxu0
  %990 = vmatprep.mubr.bf16.mxu0 %v903
  %991 = vmatmul.mubr.bf16.gmra.mxu0 %v902
  %v992 = vpop.f32.mrf.mxu0
  %v993 = vadd.f32 0.0, %v992
  %v994 = vpop.f32.mrf.mxu0
  %v995 = vpop.f32.mrf.mxu0
  %v996 = vadd.f32 0.0, %v995
  %v997 = vpop.f32.mrf.mxu0
  %998 = vmatprep.mubr.bf16.mxu0 %v905
  %999 = vmatmul.mubr.bf16.gmra.mxu0 %v904
  %v1000 = vpop.f32.mrf.mxu0
  %v1001 = vadd.f32 0.0, %v1000
  %v1002 = vpop.f32.mrf.mxu0
  %v1003 = vpop.f32.mrf.mxu0
  %v1004 = vadd.f32 0.0, %v1003
  %v1005 = vpop.f32.mrf.mxu0
  %1006 = vmatprep.mubr.bf16.mxu0 %v907
  %1007 = vmatmul.mubr.bf16.gmra.mxu0 %v906
  %v1008 = vpop.f32.mrf.mxu0
  %v1009 = vadd.f32 0.0, %v1008
  %v1010 = vpop.f32.mrf.mxu0
  %v1011 = vpop.f32.mrf.mxu0
  %v1012 = vadd.f32 0.0, %v1011
  %v1013 = vpop.f32.mrf.mxu0
  %1014 = vmatprep.mubr.bf16.mxu0 %v909
  %1015 = vmatmul.mubr.bf16.gmra.mxu0 %v908
  %v1016 = vpop.f32.mrf.mxu0
  %v1017 = vadd.f32 0.0, %v1016
  %v1018 = vpop.f32.mrf.mxu0
  %v1019 = vpop.f32.mrf.mxu0
  %v1020 = vadd.f32 0.0, %v1019
  %v1021 = vpop.f32.mrf.mxu0
  %1022 = vdwg.mxu0
  %v1023 = vld [vmem:[%s6 + $0x40] sm:$0xff]
  %v1024 = vld [vmem:[%s6 + $0x48] sm:$0xff]
  %v1025 = vld [vmem:[%s6 + $0x50] sm:$0xff]
  %v1026 = vld [vmem:[%s6 + $0x58] sm:$0xff]
  %v1027 = vld [vmem:[%s6 + $0xb8] sm:$0xff]
  %v1028 = vld [vmem:[%s6 + $0xc0] sm:$0xff]
  %v1029 = vld [vmem:[%s6 + $0xc8] sm:$0xff]
  %v1030 = vld [vmem:[%s6 + $0xd0] sm:$0xff]
  %v1031 = vsel %vm360, %v961, 0.0
  %1032 = vadd.xlane.f32.xlu0 %v1031
  %v1033 = vpop.xlane.xlu0 %1032
  %v1034 = vsel %vm360, %v964, 0.0
  %1035 = vadd.xlane.f32.xlu0 %v1034
  %v1036 = vpop.xlane.xlu0 %1035
  %v1037 = vsel %vm360, %v969, 0.0
  %1038 = vadd.xlane.f32.xlu0 %v1037
  %v1039 = vpop.xlane.xlu0 %1038
  %v1040 = vsel %vm360, %v972, 0.0
  %1041 = vadd.xlane.f32.xlu0 %v1040
  %v1042 = vpop.xlane.xlu0 %1041
  %v1043 = vsel %vm360, %v977, 0.0
  %1044 = vadd.xlane.f32.xlu0 %v1043
  %v1045 = vpop.xlane.xlu0 %1044
  %v1046 = vsel %vm360, %v980, 0.0
  %1047 = vadd.xlane.f32.xlu0 %v1046
  %v1048 = vpop.xlane.xlu0 %1047
  %v1049 = vsel %vm360, %v985, 0.0
  %1050 = vadd.xlane.f32.xlu0 %v1049
  %v1051 = vpop.xlane.xlu0 %1050
  %v1052 = vsel %vm360, %v988, 0.0
  %1053 = vadd.xlane.f32.xlu0 %v1052
  %v1054 = vpop.xlane.xlu0 %1053
  %v1055 = vsel %vm360, %v993, 0.0
  %1056 = vadd.xlane.f32.xlu0 %v1055
  %v1057 = vpop.xlane.xlu0 %1056
  %v1058 = vsel %vm360, %v996, 0.0
  %1059 = vadd.xlane.f32.xlu0 %v1058
  %v1060 = vpop.xlane.xlu0 %1059
  %v1061 = vsel %vm360, %v1001, 0.0
  %1062 = vadd.xlane.f32.xlu0 %v1061
  %v1063 = vpop.xlane.xlu0 %1062
  %v1064 = vsel %vm360, %v1004, 0.0
  %1065 = vadd.xlane.f32.xlu0 %v1064
  %v1066 = vpop.xlane.xlu0 %1065
  %v1067 = vsel %vm360, %v1009, 0.0
  %1068 = vadd.xlane.f32.xlu0 %v1067
  %v1069 = vpop.xlane.xlu0 %1068
  %v1070 = vsel %vm360, %v1012, 0.0
  %1071 = vadd.xlane.f32.xlu0 %v1070
  %v1072 = vpop.xlane.xlu0 %1071
  %v1073 = vsel %vm360, %v1017, 0.0
  %1074 = vadd.xlane.f32.xlu0 %v1073
  %v1075 = vpop.xlane.xlu0 %1074
  %v1076 = vsel %vm360, %v1020, 0.0
  %1077 = vadd.xlane.f32.xlu0 %v1076
  %v1078 = vpop.xlane.xlu0 %1077
  %v1079 = vmul.f32 %v961, %v961
  %v1080 = vmul.f32 %v964, %v964
  %v1081 = vmul.f32 %v969, %v969
  %v1082 = vmul.f32 %v972, %v972
  %v1083 = vmul.f32 %v977, %v977
  %v1084 = vmul.f32 %v980, %v980
  %v1085 = vmul.f32 %v985, %v985
  %v1086 = vmul.f32 %v988, %v988
  %v1087 = vmul.f32 %v993, %v993
  %v1088 = vmul.f32 %v996, %v996
  %v1089 = vmul.f32 %v1001, %v1001
  %v1090 = vmul.f32 %v1004, %v1004
  %v1091 = vmul.f32 %v1009, %v1009
  %v1092 = vmul.f32 %v1012, %v1012
  %v1093 = vmul.f32 %v1017, %v1017
  %v1094 = vmul.f32 %v1020, %v1020
  %v1095 = vsel %vm360, %v1079, 0.0
  %1096 = vadd.xlane.f32.xlu0 %v1095
  %v1097 = vpop.xlane.xlu0 %1096
  %v1098 = vsel %vm360, %v1080, 0.0
  %1099 = vadd.xlane.f32.xlu0 %v1098
  %v1100 = vpop.xlane.xlu0 %1099
  %v1101 = vsel %vm360, %v1081, 0.0
  %1102 = vadd.xlane.f32.xlu0 %v1101
  %v1103 = vpop.xlane.xlu0 %1102
  %v1104 = vsel %vm360, %v1082, 0.0
  %1105 = vadd.xlane.f32.xlu0 %v1104
  %v1106 = vpop.xlane.xlu0 %1105
  %v1107 = vsel %vm360, %v1083, 0.0
  %1108 = vadd.xlane.f32.xlu0 %v1107
  %v1109 = vpop.xlane.xlu0 %1108
  %v1110 = vsel %vm360, %v1084, 0.0
  %1111 = vadd.xlane.f32.xlu0 %v1110
  %v1112 = vpop.xlane.xlu0 %1111
  %v1113 = vsel %vm360, %v1085, 0.0
  %1114 = vadd.xlane.f32.xlu0 %v1113
  %v1115 = vpop.xlane.xlu0 %1114
  %v1116 = vsel %vm360, %v1086, 0.0
  %1117 = vadd.xlane.f32.xlu0 %v1116
  %v1118 = vpop.xlane.xlu0 %1117
  %v1119 = vsel %vm360, %v1087, 0.0
  %1120 = vadd.xlane.f32.xlu0 %v1119
  %v1121 = vpop.xlane.xlu0 %1120
  %v1122 = vsel %vm360, %v1088, 0.0
  %1123 = vadd.xlane.f32.xlu0 %v1122
  %v1124 = vpop.xlane.xlu0 %1123
  %v1125 = vsel %vm360, %v1089, 0.0
  %1126 = vadd.xlane.f32.xlu0 %v1125
  %v1127 = vpop.xlane.xlu0 %1126
  %v1128 = vsel %vm360, %v1090, 0.0
  %1129 = vadd.xlane.f32.xlu0 %v1128
  %v1130 = vpop.xlane.xlu0 %1129
  %v1131 = vsel %vm360, %v1091, 0.0
  %1132 = vadd.xlane.f32.xlu0 %v1131
  %v1133 = vpop.xlane.xlu0 %1132
  %v1134 = vsel %vm360, %v1092, 0.0
  %1135 = vadd.xlane.f32.xlu0 %v1134
  %v1136 = vpop.xlane.xlu0 %1135
  %v1137 = vsel %vm360, %v1093, 0.0
  %1138 = vadd.xlane.f32.xlu0 %v1137
  %v1139 = vpop.xlane.xlu0 %1138
  %v1140 = vsel %vm360, %v1094, 0.0
  %1141 = vadd.xlane.f32.xlu0 %v1140
  %v1142 = vpop.xlane.xlu0 %1141
  %v1143 = vadd.f32 %v1033, %v1045
  %v1144 = vadd.f32 %v1036, %v1048
  %v1145 = vadd.f32 %v1039, %v1051
  %v1146 = vadd.f32 %v1042, %v1054
  %v1147 = vadd.f32 %v1097, %v1109
  %v1148 = vadd.f32 %v1100, %v1112
  %v1149 = vadd.f32 %v1103, %v1115
  %v1150 = vadd.f32 %v1106, %v1118
  %v1151 = vadd.f32 %v1143, %v1057
  %v1152 = vadd.f32 %v1144, %v1060
  %v1153 = vadd.f32 %v1145, %v1063
  %v1154 = vadd.f32 %v1146, %v1066
  %v1155 = vadd.f32 %v1147, %v1121
  %v1156 = vadd.f32 %v1148, %v1124
  %v1157 = vadd.f32 %v1149, %v1127
  %v1158 = vadd.f32 %v1150, %v1130
  %v1159 = vadd.f32 %v1151, %v1069
  %v1160 = vadd.f32 %v1152, %v1072
  %v1161 = vadd.f32 %v1153, %v1075
  %v1162 = vadd.f32 %v1154, %v1078
  %v1163 = vadd.f32 %v1155, %v1133
  %v1164 = vadd.f32 %v1156, %v1136
  %v1165 = vadd.f32 %v1157, %v1139
  %v1166 = vadd.f32 %v1158, %v1142
  %v1167 = vmul.f32 %v1159, 0.008928572
  %v1168 = vmul.f32 %v1160, 0.008928572
  %v1169 = vmul.f32 %v1161, 0.008928572
  %v1170 = vmul.f32 %v1162, 0.008928572
  %v1171 = vmul.f32 %v1163, 0.008928572
  %v1172 = vmul.f32 %v1164, 0.008928572
  %v1173 = vmul.f32 %v1165, 0.008928572
  %v1174 = vmul.f32 %v1166, 0.008928572
  %v1175 = vmul.f32 %v1167, %v1167
  %v1176 = vmul.f32 %v1168, %v1168
  %v1177 = vmul.f32 %v1169, %v1169
  %v1178 = vmul.f32 %v1170, %v1170
  %v1179 = vsub.f32 %v1171, %v1175
  %v1180 = vsub.f32 %v1172, %v1176
  %v1181 = vsub.f32 %v1173, %v1177
  %v1182 = vsub.f32 %v1174, %v1178
  %v1183 = vmax.f32 %v1179, 0.0
  %v1184 = vmax.f32 %v1180, 0.0
  %v1185 = vmax.f32 %v1181, 0.0
  %v1186 = vmax.f32 %v1182, 0.0
  %v1187 = vadd.f32 %v1183, 1e-05
  %v1188 = vadd.f32 %v1184, 1e-05
  %v1189 = vadd.f32 %v1185, 1e-05
  %v1190 = vadd.f32 %v1186, 1e-05
  %v1191 = vrsqrt.pop %v1187
  %v1192 = vrsqrt.pop %v1188
  %v1193 = vrsqrt.pop %v1189
  %v1194 = vrsqrt.pop %v1190
  %v1195 = vmul.f32 %v1023, %v1191
  %v1196 = vmul.f32 %v1024, %v1192
  %v1197 = vmul.f32 %v1025, %v1193
  %v1198 = vmul.f32 %v1026, %v1194
  %v1199 = vmul.f32 %v1167, %v1195
  %v1200 = vmul.f32 %v1168, %v1196
  %v1201 = vmul.f32 %v1169, %v1197
  %v1202 = vmul.f32 %v1170, %v1198
  %v1203 = vsub.f32 %v1027, %v1199
  %v1204 = vsub.f32 %v1028, %v1200
  %v1205 = vsub.f32 %v1029, %v1201
  %v1206 = vsub.f32 %v1030, %v1202
  %1208 = vset.pattern.permute.xlu0 0
  %1209 = vperm.xlu0 %1208, %v1195
  %v1210 = vpop.permute.xlu0 %1209
  %1213 = vset.pattern.permute.xlu0 0
  %1214 = vperm.xlu0 %1213, %v1196
  %v1215 = vpop.permute.xlu0 %1214
  %1218 = vset.pattern.permute.xlu0 0
  %1219 = vperm.xlu0 %1218, %v1197
  %v1220 = vpop.permute.xlu0 %1219
  %1223 = vset.pattern.permute.xlu0 0
  %1224 = vperm.xlu0 %1223, %v1198
  %v1225 = vpop.permute.xlu0 %1224
  %v1227 = vmul.f32 %v961, %v1210
  %v1228 = vmul.f32 %v964, %v1215
  %v1229 = vmul.f32 %v969, %v1220
  %v1230 = vmul.f32 %v972, %v1225
  %v1231 = vmul.f32 %v977, %v1210
  %v1232 = vmul.f32 %v980, %v1215
  %v1233 = vmul.f32 %v985, %v1220
  %v1234 = vmul.f32 %v988, %v1225
  %v1235 = vmul.f32 %v993, %v1210
  %v1236 = vmul.f32 %v996, %v1215
  %v1237 = vmul.f32 %v1001, %v1220
  %v1238 = vmul.f32 %v1004, %v1225
  %v1239 = vmul.f32 %v1009, %v1210
  %v1240 = vmul.f32 %v1012, %v1215
  %v1241 = vmul.f32 %v1017, %v1220
  %v1242 = vmul.f32 %v1020, %v1225
  %1244 = vset.pattern.permute.xlu0 0
  %1245 = vperm.xlu0 %1244, %v1203
  %v1246 = vpop.permute.xlu0 %1245
  %1249 = vset.pattern.permute.xlu0 0
  %1250 = vperm.xlu0 %1249, %v1204
  %v1251 = vpop.permute.xlu0 %1250
  %1254 = vset.pattern.permute.xlu0 0
  %1255 = vperm.xlu0 %1254, %v1205
  %v1256 = vpop.permute.xlu0 %1255
  %1259 = vset.pattern.permute.xlu0 0
  %1260 = vperm.xlu0 %1259, %v1206
  %v1261 = vpop.permute.xlu0 %1260
  %v1263 = vadd.f32 %v1227, %v1246
  %v1264 = vadd.f32 %v1228, %v1251
  %v1265 = vadd.f32 %v1229, %v1256
  %v1266 = vadd.f32 %v1230, %v1261
  %v1267 = vadd.f32 %v1231, %v1246
  %v1268 = vadd.f32 %v1232, %v1251
  %v1269 = vadd.f32 %v1233, %v1256
  %v1270 = vadd.f32 %v1234, %v1261
  %v1271 = vadd.f32 %v1235, %v1246
  %v1272 = vadd.f32 %v1236, %v1251
  %v1273 = vadd.f32 %v1237, %v1256
  %v1274 = vadd.f32 %v1238, %v1261
  %v1275 = vadd.f32 %v1239, %v1246
  %v1276 = vadd.f32 %v1240, %v1251
  %v1277 = vadd.f32 %v1241, %v1256
  %v1278 = vadd.f32 %v1242, %v1261
  %v1279 = vmax.f32 %v1263, 0.0
  %v1280 = vmax.f32 %v1264, 0.0
  %v1281 = vmax.f32 %v1265, 0.0
  %v1282 = vmax.f32 %v1266, 0.0
  %v1283 = vmax.f32 %v1267, 0.0
  %v1284 = vmax.f32 %v1268, 0.0
  %v1285 = vmax.f32 %v1269, 0.0
  %v1286 = vmax.f32 %v1270, 0.0
  %v1287 = vmax.f32 %v1271, 0.0
  %v1288 = vmax.f32 %v1272, 0.0
  %v1289 = vmax.f32 %v1273, 0.0
  %v1290 = vmax.f32 %v1274, 0.0
  %v1291 = vmax.f32 %v1275, 0.0
  %v1292 = vmax.f32 %v1276, 0.0
  %v1293 = vmax.f32 %v1277, 0.0
  %v1294 = vmax.f32 %v1278, 0.0
  %1299 = vrot.lane.b32.xlu0 %v1291, 1
  %v1300 = vpop.permute.xlu0 %1299
  %1301 = vrot.lane.b32.xlu0 %v1292, 1
  %v1302 = vpop.permute.xlu0 %1301
  %1303 = vrot.lane.b32.xlu0 %v1293, 1
  %v1304 = vpop.permute.xlu0 %1303
  %1305 = vrot.lane.b32.xlu0 %v1294, 1
  %v1306 = vpop.permute.xlu0 %1305
  %v1311 = vsel %vm729, 0.0, %v1300
  %v1312 = vsel %vm729, 0.0, %v1302
  %v1313 = vsel %vm729, 0.0, %v1304
  %v1314 = vsel %vm729, 0.0, %v1306
  %v1315 = vsel %vm738, %v1311, 0.0
  %v1316 = vsel %vm738, %v1312, 0.0
  %v1317 = vsel %vm738, %v1313, 0.0
  %v1318 = vsel %vm738, %v1314, 0.0
  %v1319 = vsel %vm747, %v1315, %v1300
  %v1320 = vsel %vm747, %v1316, %v1302
  %v1321 = vsel %vm747, %v1317, %v1304
  %v1322 = vsel %vm747, %v1318, %v1306
  %1327 = vrot.lane.b32.xlu0 %v1279, 127
  %v1328 = vpop.permute.xlu0 %1327
  %1329 = vrot.lane.b32.xlu0 %v1280, 127
  %v1330 = vpop.permute.xlu0 %1329
  %1331 = vrot.lane.b32.xlu0 %v1281, 127
  %v1332 = vpop.permute.xlu0 %1331
  %1333 = vrot.lane.b32.xlu0 %v1282, 127
  %v1334 = vpop.permute.xlu0 %1333
  %v1339 = vsel %vm788, %v1328, 0.0
  %v1340 = vsel %vm788, %v1330, 0.0
  %v1341 = vsel %vm788, %v1332, 0.0
  %v1342 = vsel %vm788, %v1334, 0.0
  %v1343 = vsel %vm738, %v1339, %v1328
  %v1344 = vsel %vm738, %v1340, %v1330
  %v1345 = vsel %vm738, %v1341, %v1332
  %v1346 = vsel %vm738, %v1342, %v1334
  %v1347 = vsel %vm805, %v1343, 0.0
  %v1348 = vsel %vm805, %v1344, 0.0
  %v1349 = vsel %vm805, %v1345, 0.0
  %v1350 = vsel %vm805, %v1346, 0.0
  %v1351 = vld [vmem:[%s3] sm:$0xff]
  %v1352 = vld [vmem:[%s3 + $0x8] sm:$0xff]
  %v1353 = vld [vmem:[%s3 + $0x10] sm:$0xff]
  %v1354 = vld [vmem:[%s3 + $0x18] sm:$0xff]
  %v1355 = vld [vmem:[%s3 + $0x20] sm:$0xff]
  %v1356 = vld [vmem:[%s3 + $0x28] sm:$0xff]
  %v1357 = vld [vmem:[%s3 + $0x30] sm:$0xff]
  %v1358 = vld [vmem:[%s3 + $0x38] sm:$0xff]
  %v1359 = vld [vmem:[%s3 + $0x40] sm:$0xff]
  %v1360 = vld [vmem:[%s3 + $0x48] sm:$0xff]
  %v1361 = vld [vmem:[%s3 + $0x50] sm:$0xff]
  %v1362 = vld [vmem:[%s3 + $0x58] sm:$0xff]
  %v1363 = vld [vmem:[%s3 + $0x60] sm:$0xff]
  %v1364 = vld [vmem:[%s3 + $0x68] sm:$0xff]
  %v1365 = vld [vmem:[%s3 + $0x70] sm:$0xff]
  %v1366 = vld [vmem:[%s3 + $0x78] sm:$0xff]
  %v1367 = vpack.c.bf16 %v1280, %v1279
  %v1368 = vpack.c.bf16 %v1282, %v1281
  %v1369 = vpack.c.bf16 %v1284, %v1283
  %v1370 = vpack.c.bf16 %v1286, %v1285
  %v1371 = vpack.c.bf16 %v1288, %v1287
  %v1372 = vpack.c.bf16 %v1290, %v1289
  %v1373 = vpack.c.bf16 %v1292, %v1291
  %v1374 = vpack.c.bf16 %v1294, %v1293
  %v1375 = vpack.c.bf16 %v1320, %v1319
  %v1376 = vpack.c.bf16 %v1322, %v1321
  %v1377 = vpack.c.bf16 %v1348, %v1347
  %v1378 = vpack.c.bf16 %v1350, %v1349
  %v1395 = vunpack.c.l.b16 %v1351
  %v1396 = vunpack.c.h.b16 %v1351
  %v1397 = vunpack.c.l.b16 %v1352
  %v1398 = vunpack.c.h.b16 %v1352
  %v1399 = vunpack.c.l.b16 %v1353
  %v1400 = vunpack.c.h.b16 %v1353
  %v1401 = vunpack.c.l.b16 %v1354
  %v1402 = vunpack.c.h.b16 %v1354
  %v1403 = vunpack.c.l.b16 %v1355
  %v1404 = vunpack.c.h.b16 %v1355
  %v1405 = vunpack.c.l.b16 %v1356
  %v1406 = vunpack.c.h.b16 %v1356
  %v1407 = vunpack.c.l.b16 %v1357
  %v1408 = vunpack.c.h.b16 %v1357
  %v1409 = vunpack.c.l.b16 %v1358
  %v1410 = vunpack.c.h.b16 %v1358
  %v1411 = vunpack.c.l.b16 %v1359
  %v1412 = vunpack.c.h.b16 %v1359
  %v1413 = vunpack.c.l.b16 %v1360
  %v1414 = vunpack.c.h.b16 %v1360
  %v1415 = vunpack.c.l.b16 %v1361
  %v1416 = vunpack.c.h.b16 %v1361
  %v1417 = vunpack.c.l.b16 %v1362
  %v1418 = vunpack.c.h.b16 %v1362
  %v1419 = vunpack.c.l.b16 %v1363
  %v1420 = vunpack.c.h.b16 %v1363
  %v1421 = vunpack.c.l.b16 %v1364
  %v1422 = vunpack.c.h.b16 %v1364
  %v1423 = vunpack.c.l.b16 %v1365
  %v1424 = vunpack.c.h.b16 %v1365
  %v1425 = vunpack.c.l.b16 %v1366
  %v1426 = vunpack.c.h.b16 %v1366
  %v1427 = vpack.c.b16 %v1397, %v1395
  %v1428 = vpack.c.b16 %v1398, %v1396
  %v1429 = vpack.c.b16 %v1401, %v1399
  %v1430 = vpack.c.b16 %v1402, %v1400
  %v1431 = vpack.c.b16 %v1405, %v1403
  %v1432 = vpack.c.b16 %v1406, %v1404
  %v1433 = vpack.c.b16 %v1409, %v1407
  %v1434 = vpack.c.b16 %v1410, %v1408
  %v1435 = vpack.c.b16 %v1413, %v1411
  %v1436 = vpack.c.b16 %v1414, %v1412
  %v1437 = vpack.c.b16 %v1417, %v1415
  %v1438 = vpack.c.b16 %v1418, %v1416
  %v1439 = vpack.c.b16 %v1421, %v1419
  %v1440 = vpack.c.b16 %v1422, %v1420
  %v1441 = vpack.c.b16 %v1425, %v1423
  %v1442 = vpack.c.b16 %v1426, %v1424
  %vm1451 = vcmask 523264
  %v1453 = vsel %vm1451, %v1428, 0
  %v1456 = vsel %vm1451, %v1430, 0
  %v1459 = vsel %vm1451, %v1432, 0
  %v1462 = vsel %vm1451, %v1434, 0
  %v1465 = vsel %vm1451, %v1436, 0
  %v1468 = vsel %vm1451, %v1438, 0
  %v1471 = vsel %vm1451, %v1440, 0
  %v1474 = vsel %vm1451, %v1442, 0
  %1476 = vmatprep.subr.bf16.mxu0 0
  %1477 = vmatpush1.bf16.msra.mxu0 %v1374
  %1478 = vmatprep.subr.bf16.mxu0 0
  %1479 = vmatpush1.bf16.msra.mxu0 %v1373
  %1480 = vmatprep.subr.bf16.mxu0 0
  %1481 = vmatpush1.bf16.msra.mxu0 %v1372
  %1482 = vmatprep.subr.bf16.mxu0 0
  %1483 = vmatpush1.bf16.msra.mxu0 %v1371
  %1484 = vmatprep.subr.bf16.mxu0 0
  %1485 = vmatpush1.bf16.msra.mxu0 %v1370
  %1486 = vmatprep.subr.bf16.mxu0 0
  %1487 = vmatpush1.bf16.msra.mxu0 %v1369
  %1488 = vmatprep.subr.bf16.mxu0 0
  %1489 = vmatpush1.bf16.msra.mxu0 %v1368
  %1490 = vmatprep.subr.bf16.mxu0 0
  %1491 = vmatpush1.bf16.msra.mxu0 %v1367
  %1492 = vmatprep.subr.bf16.mxu0 0
  %1493 = vmatpush2.bf16.msra.mxu0 0
  %1494 = vmatprep.subr.bf16.mxu0 0
  %1495 = vmatpush2.bf16.msra.mxu0 0
  %1496 = vmatprep.subr.bf16.mxu0 0
  %1497 = vmatpush2.bf16.msra.mxu0 0
  %1498 = vmatprep.subr.bf16.mxu0 0
  %1499 = vmatpush2.bf16.msra.mxu0 0
  %1500 = vmatprep.subr.bf16.mxu0 0
  %1501 = vmatpush2.bf16.msra.mxu0 %v1378
  %1502 = vmatprep.subr.bf16.mxu0 0
  %1503 = vmatpush2.bf16.msra.mxu0 %v1377
  %1504 = vmatprep.subr.bf16.mxu0 0
  %1505 = vmatpush2.bf16.msra.mxu0 %v1376
  %1506 = vmatprep.subr.bf16.mxu0 0
  %1507 = vmatpush2.bf16.msra.mxu0 %v1375
  %1508 = vmatprep.mubr.bf16.mxu0 %v1453
  %1509 = vmatmul.mubr.bf16.gmra.mxu0 %v1427
  %v1510 = vpop.f32.mrf.mxu0
  %v1511 = vadd.f32 0.0, %v1510
  %v1512 = vpop.f32.mrf.mxu0
  %v1513 = vpop.f32.mrf.mxu0
  %v1514 = vadd.f32 0.0, %v1513
  %v1515 = vpop.f32.mrf.mxu0
  %1516 = vmatprep.mubr.bf16.mxu0 %v1456
  %1517 = vmatmul.mubr.bf16.gmra.mxu0 %v1429
  %v1518 = vpop.f32.mrf.mxu0
  %v1519 = vadd.f32 0.0, %v1518
  %v1520 = vpop.f32.mrf.mxu0
  %v1521 = vpop.f32.mrf.mxu0
  %v1522 = vadd.f32 0.0, %v1521
  %v1523 = vpop.f32.mrf.mxu0
  %1524 = vmatprep.mubr.bf16.mxu0 %v1459
  %1525 = vmatmul.mubr.bf16.gmra.mxu0 %v1431
  %v1526 = vpop.f32.mrf.mxu0
  %v1527 = vadd.f32 0.0, %v1526
  %v1528 = vpop.f32.mrf.mxu0
  %v1529 = vpop.f32.mrf.mxu0
  %v1530 = vadd.f32 0.0, %v1529
  %v1531 = vpop.f32.mrf.mxu0
  %1532 = vmatprep.mubr.bf16.mxu0 %v1462
  %1533 = vmatmul.mubr.bf16.gmra.mxu0 %v1433
  %v1534 = vpop.f32.mrf.mxu0
  %v1535 = vadd.f32 0.0, %v1534
  %v1536 = vpop.f32.mrf.mxu0
  %v1537 = vpop.f32.mrf.mxu0
  %v1538 = vadd.f32 0.0, %v1537
  %v1539 = vpop.f32.mrf.mxu0
  %1540 = vmatprep.mubr.bf16.mxu0 %v1465
  %1541 = vmatmul.mubr.bf16.gmra.mxu0 %v1435
  %v1542 = vpop.f32.mrf.mxu0
  %v1543 = vadd.f32 0.0, %v1542
  %v1544 = vpop.f32.mrf.mxu0
  %v1545 = vpop.f32.mrf.mxu0
  %v1546 = vadd.f32 0.0, %v1545
  %v1547 = vpop.f32.mrf.mxu0
  %1548 = vmatprep.mubr.bf16.mxu0 %v1468
  %1549 = vmatmul.mubr.bf16.gmra.mxu0 %v1437
  %v1550 = vpop.f32.mrf.mxu0
  %v1551 = vadd.f32 0.0, %v1550
  %v1552 = vpop.f32.mrf.mxu0
  %v1553 = vpop.f32.mrf.mxu0
  %v1554 = vadd.f32 0.0, %v1553
  %v1555 = vpop.f32.mrf.mxu0
  %1556 = vmatprep.mubr.bf16.mxu0 %v1471
  %1557 = vmatmul.mubr.bf16.gmra.mxu0 %v1439
  %v1558 = vpop.f32.mrf.mxu0
  %v1559 = vadd.f32 0.0, %v1558
  %v1560 = vpop.f32.mrf.mxu0
  %v1561 = vpop.f32.mrf.mxu0
  %v1562 = vadd.f32 0.0, %v1561
  %v1563 = vpop.f32.mrf.mxu0
  %1564 = vmatprep.mubr.bf16.mxu0 %v1474
  %1565 = vmatmul.mubr.bf16.gmra.mxu0 %v1441
  %v1566 = vpop.f32.mrf.mxu0
  %v1567 = vadd.f32 0.0, %v1566
  %v1568 = vpop.f32.mrf.mxu0
  %v1569 = vpop.f32.mrf.mxu0
  %v1570 = vadd.f32 0.0, %v1569
  %v1571 = vpop.f32.mrf.mxu0
  %1572 = vdwg.mxu0
  %v1573 = vld [vmem:[%s6 + $0x60] sm:$0xff]
  %v1574 = vld [vmem:[%s6 + $0x68] sm:$0xff]
  %v1575 = vld [vmem:[%s6 + $0xd8] sm:$0xff]
  %v1576 = vld [vmem:[%s6 + $0xe0] sm:$0xff]
  %v1577 = vsel %vm360, %v1511, 0.0
  %1578 = vadd.xlane.f32.xlu0 %v1577
  %v1579 = vpop.xlane.xlu0 %1578
  %v1580 = vsel %vm360, %v1514, 0.0
  %1581 = vadd.xlane.f32.xlu0 %v1580
  %v1582 = vpop.xlane.xlu0 %1581
  %v1583 = vsel %vm360, %v1519, 0.0
  %1584 = vadd.xlane.f32.xlu0 %v1583
  %v1585 = vpop.xlane.xlu0 %1584
  %v1586 = vsel %vm360, %v1522, 0.0
  %1587 = vadd.xlane.f32.xlu0 %v1586
  %v1588 = vpop.xlane.xlu0 %1587
  %v1589 = vsel %vm360, %v1527, 0.0
  %1590 = vadd.xlane.f32.xlu0 %v1589
  %v1591 = vpop.xlane.xlu0 %1590
  %v1592 = vsel %vm360, %v1530, 0.0
  %1593 = vadd.xlane.f32.xlu0 %v1592
  %v1594 = vpop.xlane.xlu0 %1593
  %v1595 = vsel %vm360, %v1535, 0.0
  %1596 = vadd.xlane.f32.xlu0 %v1595
  %v1597 = vpop.xlane.xlu0 %1596
  %v1598 = vsel %vm360, %v1538, 0.0
  %1599 = vadd.xlane.f32.xlu0 %v1598
  %v1600 = vpop.xlane.xlu0 %1599
  %v1601 = vsel %vm360, %v1543, 0.0
  %1602 = vadd.xlane.f32.xlu0 %v1601
  %v1603 = vpop.xlane.xlu0 %1602
  %v1604 = vsel %vm360, %v1546, 0.0
  %1605 = vadd.xlane.f32.xlu0 %v1604
  %v1606 = vpop.xlane.xlu0 %1605
  %v1607 = vsel %vm360, %v1551, 0.0
  %1608 = vadd.xlane.f32.xlu0 %v1607
  %v1609 = vpop.xlane.xlu0 %1608
  %v1610 = vsel %vm360, %v1554, 0.0
  %1611 = vadd.xlane.f32.xlu0 %v1610
  %v1612 = vpop.xlane.xlu0 %1611
  %v1613 = vsel %vm360, %v1559, 0.0
  %1614 = vadd.xlane.f32.xlu0 %v1613
  %v1615 = vpop.xlane.xlu0 %1614
  %v1616 = vsel %vm360, %v1562, 0.0
  %1617 = vadd.xlane.f32.xlu0 %v1616
  %v1618 = vpop.xlane.xlu0 %1617
  %v1619 = vsel %vm360, %v1567, 0.0
  %1620 = vadd.xlane.f32.xlu0 %v1619
  %v1621 = vpop.xlane.xlu0 %1620
  %v1622 = vsel %vm360, %v1570, 0.0
  %1623 = vadd.xlane.f32.xlu0 %v1622
  %v1624 = vpop.xlane.xlu0 %1623
  %v1625 = vmul.f32 %v1511, %v1511
  %v1626 = vmul.f32 %v1514, %v1514
  %v1627 = vmul.f32 %v1519, %v1519
  %v1628 = vmul.f32 %v1522, %v1522
  %v1629 = vmul.f32 %v1527, %v1527
  %v1630 = vmul.f32 %v1530, %v1530
  %v1631 = vmul.f32 %v1535, %v1535
  %v1632 = vmul.f32 %v1538, %v1538
  %v1633 = vmul.f32 %v1543, %v1543
  %v1634 = vmul.f32 %v1546, %v1546
  %v1635 = vmul.f32 %v1551, %v1551
  %v1636 = vmul.f32 %v1554, %v1554
  %v1637 = vmul.f32 %v1559, %v1559
  %v1638 = vmul.f32 %v1562, %v1562
  %v1639 = vmul.f32 %v1567, %v1567
  %v1640 = vmul.f32 %v1570, %v1570
  %v1641 = vsel %vm360, %v1625, 0.0
  %1642 = vadd.xlane.f32.xlu0 %v1641
  %v1643 = vpop.xlane.xlu0 %1642
  %v1644 = vsel %vm360, %v1626, 0.0
  %1645 = vadd.xlane.f32.xlu0 %v1644
  %v1646 = vpop.xlane.xlu0 %1645
  %v1647 = vsel %vm360, %v1627, 0.0
  %1648 = vadd.xlane.f32.xlu0 %v1647
  %v1649 = vpop.xlane.xlu0 %1648
  %v1650 = vsel %vm360, %v1628, 0.0
  %1651 = vadd.xlane.f32.xlu0 %v1650
  %v1652 = vpop.xlane.xlu0 %1651
  %v1653 = vsel %vm360, %v1629, 0.0
  %1654 = vadd.xlane.f32.xlu0 %v1653
  %v1655 = vpop.xlane.xlu0 %1654
  %v1656 = vsel %vm360, %v1630, 0.0
  %1657 = vadd.xlane.f32.xlu0 %v1656
  %v1658 = vpop.xlane.xlu0 %1657
  %v1659 = vsel %vm360, %v1631, 0.0
  %1660 = vadd.xlane.f32.xlu0 %v1659
  %v1661 = vpop.xlane.xlu0 %1660
  %v1662 = vsel %vm360, %v1632, 0.0
  %1663 = vadd.xlane.f32.xlu0 %v1662
  %v1664 = vpop.xlane.xlu0 %1663
  %v1665 = vsel %vm360, %v1633, 0.0
  %1666 = vadd.xlane.f32.xlu0 %v1665
  %v1667 = vpop.xlane.xlu0 %1666
  %v1668 = vsel %vm360, %v1634, 0.0
  %1669 = vadd.xlane.f32.xlu0 %v1668
  %v1670 = vpop.xlane.xlu0 %1669
  %v1671 = vsel %vm360, %v1635, 0.0
  %1672 = vadd.xlane.f32.xlu0 %v1671
  %v1673 = vpop.xlane.xlu0 %1672
  %v1674 = vsel %vm360, %v1636, 0.0
  %1675 = vadd.xlane.f32.xlu0 %v1674
  %v1676 = vpop.xlane.xlu0 %1675
  %v1677 = vsel %vm360, %v1637, 0.0
  %1678 = vadd.xlane.f32.xlu0 %v1677
  %v1679 = vpop.xlane.xlu0 %1678
  %v1680 = vsel %vm360, %v1638, 0.0
  %1681 = vadd.xlane.f32.xlu0 %v1680
  %v1682 = vpop.xlane.xlu0 %1681
  %v1683 = vsel %vm360, %v1639, 0.0
  %1684 = vadd.xlane.f32.xlu0 %v1683
  %v1685 = vpop.xlane.xlu0 %1684
  %v1686 = vsel %vm360, %v1640, 0.0
  %1687 = vadd.xlane.f32.xlu0 %v1686
  %v1688 = vpop.xlane.xlu0 %1687
  %v1689 = vadd.f32 %v1579, %v1585
  %v1690 = vadd.f32 %v1582, %v1588
  %v1691 = vadd.f32 %v1643, %v1649
  %v1692 = vadd.f32 %v1646, %v1652
  %v1693 = vadd.f32 %v1689, %v1591
  %v1694 = vadd.f32 %v1690, %v1594
  %v1695 = vadd.f32 %v1691, %v1655
  %v1696 = vadd.f32 %v1692, %v1658
  %v1697 = vadd.f32 %v1693, %v1597
  %v1698 = vadd.f32 %v1694, %v1600
  %v1699 = vadd.f32 %v1695, %v1661
  %v1700 = vadd.f32 %v1696, %v1664
  %v1701 = vadd.f32 %v1697, %v1603
  %v1702 = vadd.f32 %v1698, %v1606
  %v1703 = vadd.f32 %v1699, %v1667
  %v1704 = vadd.f32 %v1700, %v1670
  %v1705 = vadd.f32 %v1701, %v1609
  %v1706 = vadd.f32 %v1702, %v1612
  %v1707 = vadd.f32 %v1703, %v1673
  %v1708 = vadd.f32 %v1704, %v1676
  %v1709 = vadd.f32 %v1705, %v1615
  %v1710 = vadd.f32 %v1706, %v1618
  %v1711 = vadd.f32 %v1707, %v1679
  %v1712 = vadd.f32 %v1708, %v1682
  %v1713 = vadd.f32 %v1709, %v1621
  %v1714 = vadd.f32 %v1710, %v1624
  %v1715 = vadd.f32 %v1711, %v1685
  %v1716 = vadd.f32 %v1712, %v1688
  %v1717 = vmul.f32 %v1713, 0.004464286
  %v1718 = vmul.f32 %v1714, 0.004464286
  %v1719 = vmul.f32 %v1715, 0.004464286
  %v1720 = vmul.f32 %v1716, 0.004464286
  %v1721 = vmul.f32 %v1717, %v1717
  %v1722 = vmul.f32 %v1718, %v1718
  %v1723 = vsub.f32 %v1719, %v1721
  %v1724 = vsub.f32 %v1720, %v1722
  %v1725 = vmax.f32 %v1723, 0.0
  %v1726 = vmax.f32 %v1724, 0.0
  %v1727 = vadd.f32 %v1725, 1e-05
  %v1728 = vadd.f32 %v1726, 1e-05
  %v1729 = vrsqrt.pop %v1727
  %v1730 = vrsqrt.pop %v1728
  %v1731 = vmul.f32 %v1573, %v1729
  %v1732 = vmul.f32 %v1574, %v1730
  %v1733 = vmul.f32 %v1717, %v1731
  %v1734 = vmul.f32 %v1718, %v1732
  %v1735 = vsub.f32 %v1575, %v1733
  %v1736 = vsub.f32 %v1576, %v1734
  %1738 = vset.pattern.permute.xlu0 0
  %1739 = vperm.xlu0 %1738, %v1731
  %v1740 = vpop.permute.xlu0 %1739
  %1743 = vset.pattern.permute.xlu0 0
  %1744 = vperm.xlu0 %1743, %v1732
  %v1745 = vpop.permute.xlu0 %1744
  %v1747 = vmul.f32 %v1511, %v1740
  %v1748 = vmul.f32 %v1514, %v1745
  %v1749 = vmul.f32 %v1519, %v1740
  %v1750 = vmul.f32 %v1522, %v1745
  %v1751 = vmul.f32 %v1527, %v1740
  %v1752 = vmul.f32 %v1530, %v1745
  %v1753 = vmul.f32 %v1535, %v1740
  %v1754 = vmul.f32 %v1538, %v1745
  %v1755 = vmul.f32 %v1543, %v1740
  %v1756 = vmul.f32 %v1546, %v1745
  %v1757 = vmul.f32 %v1551, %v1740
  %v1758 = vmul.f32 %v1554, %v1745
  %v1759 = vmul.f32 %v1559, %v1740
  %v1760 = vmul.f32 %v1562, %v1745
  %v1761 = vmul.f32 %v1567, %v1740
  %v1762 = vmul.f32 %v1570, %v1745
  %1764 = vset.pattern.permute.xlu0 0
  %1765 = vperm.xlu0 %1764, %v1735
  %v1766 = vpop.permute.xlu0 %1765
  %1769 = vset.pattern.permute.xlu0 0
  %1770 = vperm.xlu0 %1769, %v1736
  %v1771 = vpop.permute.xlu0 %1770
  %v1773 = vadd.f32 %v1747, %v1766
  %v1774 = vadd.f32 %v1748, %v1771
  %v1775 = vadd.f32 %v1749, %v1766
  %v1776 = vadd.f32 %v1750, %v1771
  %v1777 = vadd.f32 %v1751, %v1766
  %v1778 = vadd.f32 %v1752, %v1771
  %v1779 = vadd.f32 %v1753, %v1766
  %v1780 = vadd.f32 %v1754, %v1771
  %v1781 = vadd.f32 %v1755, %v1766
  %v1782 = vadd.f32 %v1756, %v1771
  %v1783 = vadd.f32 %v1757, %v1766
  %v1784 = vadd.f32 %v1758, %v1771
  %v1785 = vadd.f32 %v1759, %v1766
  %v1786 = vadd.f32 %v1760, %v1771
  %v1787 = vadd.f32 %v1761, %v1766
  %v1788 = vadd.f32 %v1762, %v1771
  %v1789 = vmax.f32 %v1773, 0.0
  %v1790 = vmax.f32 %v1774, 0.0
  %v1791 = vmax.f32 %v1775, 0.0
  %v1792 = vmax.f32 %v1776, 0.0
  %v1793 = vmax.f32 %v1777, 0.0
  %v1794 = vmax.f32 %v1778, 0.0
  %v1795 = vmax.f32 %v1779, 0.0
  %v1796 = vmax.f32 %v1780, 0.0
  %v1797 = vmax.f32 %v1781, 0.0
  %v1798 = vmax.f32 %v1782, 0.0
  %v1799 = vmax.f32 %v1783, 0.0
  %v1800 = vmax.f32 %v1784, 0.0
  %v1801 = vmax.f32 %v1785, 0.0
  %v1802 = vmax.f32 %v1786, 0.0
  %v1803 = vmax.f32 %v1787, 0.0
  %v1804 = vmax.f32 %v1788, 0.0
  %1807 = vrot.lane.b32.xlu0 %v1803, 1
  %v1808 = vpop.permute.xlu0 %1807
  %1809 = vrot.lane.b32.xlu0 %v1804, 1
  %v1810 = vpop.permute.xlu0 %1809
  %v1813 = vsel %vm729, 0.0, %v1808
  %v1814 = vsel %vm729, 0.0, %v1810
  %v1815 = vsel %vm738, %v1813, 0.0
  %v1816 = vsel %vm738, %v1814, 0.0
  %v1817 = vsel %vm747, %v1815, %v1808
  %v1818 = vsel %vm747, %v1816, %v1810
  %1821 = vrot.lane.b32.xlu0 %v1789, 127
  %v1822 = vpop.permute.xlu0 %1821
  %1823 = vrot.lane.b32.xlu0 %v1790, 127
  %v1824 = vpop.permute.xlu0 %1823
  %v1827 = vsel %vm788, %v1822, 0.0
  %v1828 = vsel %vm788, %v1824, 0.0
  %v1829 = vsel %vm738, %v1827, %v1822
  %v1830 = vsel %vm738, %v1828, %v1824
  %v1831 = vsel %vm805, %v1829, 0.0
  %v1832 = vsel %vm805, %v1830, 0.0
  %v1833 = vld [vmem:[%s4] sm:$0xff]
  %v1834 = vld [vmem:[%s4 + $0x8] sm:$0xff]
  %v1835 = vld [vmem:[%s4 + $0x10] sm:$0xff]
  %v1836 = vld [vmem:[%s4 + $0x18] sm:$0xff]
  %v1837 = vld [vmem:[%s4 + $0x20] sm:$0xff]
  %v1838 = vld [vmem:[%s4 + $0x28] sm:$0xff]
  %v1839 = vld [vmem:[%s4 + $0x30] sm:$0xff]
  %v1840 = vld [vmem:[%s4 + $0x38] sm:$0xff]
  %v1841 = vld [vmem:[%s4 + $0x40] sm:$0xff]
  %v1842 = vld [vmem:[%s4 + $0x48] sm:$0xff]
  %v1843 = vld [vmem:[%s4 + $0x50] sm:$0xff]
  %v1844 = vld [vmem:[%s4 + $0x58] sm:$0xff]
  %v1845 = vld [vmem:[%s4 + $0x60] sm:$0xff]
  %v1846 = vld [vmem:[%s4 + $0x68] sm:$0xff]
  %v1847 = vld [vmem:[%s4 + $0x70] sm:$0xff]
  %v1848 = vld [vmem:[%s4 + $0x78] sm:$0xff]
  %v1849 = vpack.c.bf16 %v1790, %v1789
  %v1850 = vpack.c.bf16 %v1792, %v1791
  %v1851 = vpack.c.bf16 %v1794, %v1793
  %v1852 = vpack.c.bf16 %v1796, %v1795
  %v1853 = vpack.c.bf16 %v1798, %v1797
  %v1854 = vpack.c.bf16 %v1800, %v1799
  %v1855 = vpack.c.bf16 %v1802, %v1801
  %v1856 = vpack.c.bf16 %v1804, %v1803
  %v1857 = vpack.c.bf16 %v1818, %v1817
  %v1858 = vpack.c.bf16 %v1832, %v1831
  %v1875 = vunpack.c.l.b16 %v1833
  %v1876 = vunpack.c.h.b16 %v1833
  %v1877 = vunpack.c.l.b16 %v1834
  %v1878 = vunpack.c.h.b16 %v1834
  %v1879 = vunpack.c.l.b16 %v1835
  %v1880 = vunpack.c.h.b16 %v1835
  %v1881 = vunpack.c.l.b16 %v1836
  %v1882 = vunpack.c.h.b16 %v1836
  %v1883 = vunpack.c.l.b16 %v1837
  %v1884 = vunpack.c.h.b16 %v1837
  %v1885 = vunpack.c.l.b16 %v1838
  %v1886 = vunpack.c.h.b16 %v1838
  %v1887 = vunpack.c.l.b16 %v1839
  %v1888 = vunpack.c.h.b16 %v1839
  %v1889 = vunpack.c.l.b16 %v1840
  %v1890 = vunpack.c.h.b16 %v1840
  %v1891 = vunpack.c.l.b16 %v1841
  %v1892 = vunpack.c.h.b16 %v1841
  %v1893 = vunpack.c.l.b16 %v1842
  %v1894 = vunpack.c.h.b16 %v1842
  %v1895 = vunpack.c.l.b16 %v1843
  %v1896 = vunpack.c.h.b16 %v1843
  %v1897 = vunpack.c.l.b16 %v1844
  %v1898 = vunpack.c.h.b16 %v1844
  %v1899 = vunpack.c.l.b16 %v1845
  %v1900 = vunpack.c.h.b16 %v1845
  %v1901 = vunpack.c.l.b16 %v1846
  %v1902 = vunpack.c.h.b16 %v1846
  %v1903 = vunpack.c.l.b16 %v1847
  %v1904 = vunpack.c.h.b16 %v1847
  %v1905 = vunpack.c.l.b16 %v1848
  %v1906 = vunpack.c.h.b16 %v1848
  %v1907 = vpack.c.b16 %v1877, %v1875
  %v1908 = vpack.c.b16 %v1878, %v1876
  %v1909 = vpack.c.b16 %v1881, %v1879
  %v1910 = vpack.c.b16 %v1882, %v1880
  %v1911 = vpack.c.b16 %v1885, %v1883
  %v1912 = vpack.c.b16 %v1886, %v1884
  %v1913 = vpack.c.b16 %v1889, %v1887
  %v1914 = vpack.c.b16 %v1890, %v1888
  %v1915 = vpack.c.b16 %v1893, %v1891
  %v1916 = vpack.c.b16 %v1894, %v1892
  %v1917 = vpack.c.b16 %v1897, %v1895
  %v1918 = vpack.c.b16 %v1898, %v1896
  %v1919 = vpack.c.b16 %v1901, %v1899
  %v1920 = vpack.c.b16 %v1902, %v1900
  %v1921 = vpack.c.b16 %v1905, %v1903
  %v1922 = vpack.c.b16 %v1906, %v1904
  %vm1931 = vcmask 261120
  %v1933 = vsel %vm1931, %v1908, 0
  %v1936 = vsel %vm1931, %v1910, 0
  %v1939 = vsel %vm1931, %v1912, 0
  %v1942 = vsel %vm1931, %v1914, 0
  %v1945 = vsel %vm1931, %v1916, 0
  %v1948 = vsel %vm1931, %v1918, 0
  %v1951 = vsel %vm1931, %v1920, 0
  %v1954 = vsel %vm1931, %v1922, 0
  %1956 = vmatprep.subr.bf16.mxu0 0
  %1957 = vmatpush1.bf16.msra.mxu0 %v1856
  %1958 = vmatprep.subr.bf16.mxu0 0
  %1959 = vmatpush1.bf16.msra.mxu0 %v1855
  %1960 = vmatprep.subr.bf16.mxu0 0
  %1961 = vmatpush1.bf16.msra.mxu0 %v1854
  %1962 = vmatprep.subr.bf16.mxu0 0
  %1963 = vmatpush1.bf16.msra.mxu0 %v1853
  %1964 = vmatprep.subr.bf16.mxu0 0
  %1965 = vmatpush1.bf16.msra.mxu0 %v1852
  %1966 = vmatprep.subr.bf16.mxu0 0
  %1967 = vmatpush1.bf16.msra.mxu0 %v1851
  %1968 = vmatprep.subr.bf16.mxu0 0
  %1969 = vmatpush1.bf16.msra.mxu0 %v1850
  %1970 = vmatprep.subr.bf16.mxu0 0
  %1971 = vmatpush1.bf16.msra.mxu0 %v1849
  %1972 = vmatprep.subr.bf16.mxu0 0
  %1973 = vmatpush2.bf16.msra.mxu0 0
  %1974 = vmatprep.subr.bf16.mxu0 0
  %1975 = vmatpush2.bf16.msra.mxu0 0
  %1976 = vmatprep.subr.bf16.mxu0 0
  %1977 = vmatpush2.bf16.msra.mxu0 0
  %1978 = vmatprep.subr.bf16.mxu0 0
  %1979 = vmatpush2.bf16.msra.mxu0 0
  %1980 = vmatprep.subr.bf16.mxu0 0
  %1981 = vmatpush2.bf16.msra.mxu0 0
  %1982 = vmatprep.subr.bf16.mxu0 0
  %1983 = vmatpush2.bf16.msra.mxu0 0
  %1984 = vmatprep.subr.bf16.mxu0 0
  %1985 = vmatpush2.bf16.msra.mxu0 %v1858
  %1986 = vmatprep.subr.bf16.mxu0 0
  %1987 = vmatpush2.bf16.msra.mxu0 %v1857
  %1988 = vmatprep.mubr.bf16.mxu0 %v1933
  %1989 = vmatmul.mubr.bf16.gmra.mxu0 %v1907
  %v1990 = vpop.f32.mrf.mxu0
  %v1991 = vadd.f32 0.0, %v1990
  %v1992 = vpop.f32.mrf.mxu0
  %v1993 = vpop.f32.mrf.mxu0
  %v1994 = vadd.f32 0.0, %v1993
  %v1995 = vpop.f32.mrf.mxu0
  %1996 = vmatprep.mubr.bf16.mxu0 %v1936
  %1997 = vmatmul.mubr.bf16.gmra.mxu0 %v1909
  %v1998 = vpop.f32.mrf.mxu0
  %v1999 = vadd.f32 0.0, %v1998
  %v2000 = vpop.f32.mrf.mxu0
  %v2001 = vpop.f32.mrf.mxu0
  %v2002 = vadd.f32 0.0, %v2001
  %v2003 = vpop.f32.mrf.mxu0
  %2004 = vmatprep.mubr.bf16.mxu0 %v1939
  %2005 = vmatmul.mubr.bf16.gmra.mxu0 %v1911
  %v2006 = vpop.f32.mrf.mxu0
  %v2007 = vadd.f32 0.0, %v2006
  %v2008 = vpop.f32.mrf.mxu0
  %v2009 = vpop.f32.mrf.mxu0
  %v2010 = vadd.f32 0.0, %v2009
  %v2011 = vpop.f32.mrf.mxu0
  %2012 = vmatprep.mubr.bf16.mxu0 %v1942
  %2013 = vmatmul.mubr.bf16.gmra.mxu0 %v1913
  %v2014 = vpop.f32.mrf.mxu0
  %v2015 = vadd.f32 0.0, %v2014
  %v2016 = vpop.f32.mrf.mxu0
  %v2017 = vpop.f32.mrf.mxu0
  %v2018 = vadd.f32 0.0, %v2017
  %v2019 = vpop.f32.mrf.mxu0
  %2020 = vmatprep.mubr.bf16.mxu0 %v1945
  %2021 = vmatmul.mubr.bf16.gmra.mxu0 %v1915
  %v2022 = vpop.f32.mrf.mxu0
  %v2023 = vadd.f32 0.0, %v2022
  %v2024 = vpop.f32.mrf.mxu0
  %v2025 = vpop.f32.mrf.mxu0
  %v2026 = vadd.f32 0.0, %v2025
  %v2027 = vpop.f32.mrf.mxu0
  %2028 = vmatprep.mubr.bf16.mxu0 %v1948
  %2029 = vmatmul.mubr.bf16.gmra.mxu0 %v1917
  %v2030 = vpop.f32.mrf.mxu0
  %v2031 = vadd.f32 0.0, %v2030
  %v2032 = vpop.f32.mrf.mxu0
  %v2033 = vpop.f32.mrf.mxu0
  %v2034 = vadd.f32 0.0, %v2033
  %v2035 = vpop.f32.mrf.mxu0
  %2036 = vmatprep.mubr.bf16.mxu0 %v1951
  %2037 = vmatmul.mubr.bf16.gmra.mxu0 %v1919
  %v2038 = vpop.f32.mrf.mxu0
  %v2039 = vadd.f32 0.0, %v2038
  %v2040 = vpop.f32.mrf.mxu0
  %v2041 = vpop.f32.mrf.mxu0
  %v2042 = vadd.f32 0.0, %v2041
  %v2043 = vpop.f32.mrf.mxu0
  %2044 = vmatprep.mubr.bf16.mxu0 %v1954
  %2045 = vmatmul.mubr.bf16.gmra.mxu0 %v1921
  %v2046 = vpop.f32.mrf.mxu0
  %v2047 = vadd.f32 0.0, %v2046
  %v2048 = vpop.f32.mrf.mxu0
  %v2049 = vpop.f32.mrf.mxu0
  %v2050 = vadd.f32 0.0, %v2049
  %v2051 = vpop.f32.mrf.mxu0
  %2052 = vdwg.mxu0
  %v2053 = vld [vmem:[%s6 + $0x70] sm:$0xff]
  %v2054 = vld [vmem:[%s6 + $0xe8] sm:$0xff]
  %v2055 = vsel %vm360, %v1991, 0.0
  %2056 = vadd.xlane.f32.xlu0 %v2055
  %v2057 = vpop.xlane.xlu0 %2056
  %v2058 = vsel %vm360, %v1994, 0.0
  %2059 = vadd.xlane.f32.xlu0 %v2058
  %v2060 = vpop.xlane.xlu0 %2059
  %v2061 = vsel %vm360, %v1999, 0.0
  %2062 = vadd.xlane.f32.xlu0 %v2061
  %v2063 = vpop.xlane.xlu0 %2062
  %v2064 = vsel %vm360, %v2002, 0.0
  %2065 = vadd.xlane.f32.xlu0 %v2064
  %v2066 = vpop.xlane.xlu0 %2065
  %v2067 = vsel %vm360, %v2007, 0.0
  %2068 = vadd.xlane.f32.xlu0 %v2067
  %v2069 = vpop.xlane.xlu0 %2068
  %v2070 = vsel %vm360, %v2010, 0.0
  %2071 = vadd.xlane.f32.xlu0 %v2070
  %v2072 = vpop.xlane.xlu0 %2071
  %v2073 = vsel %vm360, %v2015, 0.0
  %2074 = vadd.xlane.f32.xlu0 %v2073
  %v2075 = vpop.xlane.xlu0 %2074
  %v2076 = vsel %vm360, %v2018, 0.0
  %2077 = vadd.xlane.f32.xlu0 %v2076
  %v2078 = vpop.xlane.xlu0 %2077
  %v2079 = vsel %vm360, %v2023, 0.0
  %2080 = vadd.xlane.f32.xlu0 %v2079
  %v2081 = vpop.xlane.xlu0 %2080
  %v2082 = vsel %vm360, %v2026, 0.0
  %2083 = vadd.xlane.f32.xlu0 %v2082
  %v2084 = vpop.xlane.xlu0 %2083
  %v2085 = vsel %vm360, %v2031, 0.0
  %2086 = vadd.xlane.f32.xlu0 %v2085
  %v2087 = vpop.xlane.xlu0 %2086
  %v2088 = vsel %vm360, %v2034, 0.0
  %2089 = vadd.xlane.f32.xlu0 %v2088
  %v2090 = vpop.xlane.xlu0 %2089
  %v2091 = vsel %vm360, %v2039, 0.0
  %2092 = vadd.xlane.f32.xlu0 %v2091
  %v2093 = vpop.xlane.xlu0 %2092
  %v2094 = vsel %vm360, %v2042, 0.0
  %2095 = vadd.xlane.f32.xlu0 %v2094
  %v2096 = vpop.xlane.xlu0 %2095
  %v2097 = vsel %vm360, %v2047, 0.0
  %2098 = vadd.xlane.f32.xlu0 %v2097
  %v2099 = vpop.xlane.xlu0 %2098
  %v2100 = vsel %vm360, %v2050, 0.0
  %2101 = vadd.xlane.f32.xlu0 %v2100
  %v2102 = vpop.xlane.xlu0 %2101
  %v2103 = vmul.f32 %v1991, %v1991
  %v2104 = vmul.f32 %v1994, %v1994
  %v2105 = vmul.f32 %v1999, %v1999
  %v2106 = vmul.f32 %v2002, %v2002
  %v2107 = vmul.f32 %v2007, %v2007
  %v2108 = vmul.f32 %v2010, %v2010
  %v2109 = vmul.f32 %v2015, %v2015
  %v2110 = vmul.f32 %v2018, %v2018
  %v2111 = vmul.f32 %v2023, %v2023
  %v2112 = vmul.f32 %v2026, %v2026
  %v2113 = vmul.f32 %v2031, %v2031
  %v2114 = vmul.f32 %v2034, %v2034
  %v2115 = vmul.f32 %v2039, %v2039
  %v2116 = vmul.f32 %v2042, %v2042
  %v2117 = vmul.f32 %v2047, %v2047
  %v2118 = vmul.f32 %v2050, %v2050
  %v2119 = vsel %vm360, %v2103, 0.0
  %2120 = vadd.xlane.f32.xlu0 %v2119
  %v2121 = vpop.xlane.xlu0 %2120
  %v2122 = vsel %vm360, %v2104, 0.0
  %2123 = vadd.xlane.f32.xlu0 %v2122
  %v2124 = vpop.xlane.xlu0 %2123
  %v2125 = vsel %vm360, %v2105, 0.0
  %2126 = vadd.xlane.f32.xlu0 %v2125
  %v2127 = vpop.xlane.xlu0 %2126
  %v2128 = vsel %vm360, %v2106, 0.0
  %2129 = vadd.xlane.f32.xlu0 %v2128
  %v2130 = vpop.xlane.xlu0 %2129
  %v2131 = vsel %vm360, %v2107, 0.0
  %2132 = vadd.xlane.f32.xlu0 %v2131
  %v2133 = vpop.xlane.xlu0 %2132
  %v2134 = vsel %vm360, %v2108, 0.0
  %2135 = vadd.xlane.f32.xlu0 %v2134
  %v2136 = vpop.xlane.xlu0 %2135
  %v2137 = vsel %vm360, %v2109, 0.0
  %2138 = vadd.xlane.f32.xlu0 %v2137
  %v2139 = vpop.xlane.xlu0 %2138
  %v2140 = vsel %vm360, %v2110, 0.0
  %2141 = vadd.xlane.f32.xlu0 %v2140
  %v2142 = vpop.xlane.xlu0 %2141
  %v2143 = vsel %vm360, %v2111, 0.0
  %2144 = vadd.xlane.f32.xlu0 %v2143
  %v2145 = vpop.xlane.xlu0 %2144
  %v2146 = vsel %vm360, %v2112, 0.0
  %2147 = vadd.xlane.f32.xlu0 %v2146
  %v2148 = vpop.xlane.xlu0 %2147
  %v2149 = vsel %vm360, %v2113, 0.0
  %2150 = vadd.xlane.f32.xlu0 %v2149
  %v2151 = vpop.xlane.xlu0 %2150
  %v2152 = vsel %vm360, %v2114, 0.0
  %2153 = vadd.xlane.f32.xlu0 %v2152
  %v2154 = vpop.xlane.xlu0 %2153
  %v2155 = vsel %vm360, %v2115, 0.0
  %2156 = vadd.xlane.f32.xlu0 %v2155
  %v2157 = vpop.xlane.xlu0 %2156
  %v2158 = vsel %vm360, %v2116, 0.0
  %2159 = vadd.xlane.f32.xlu0 %v2158
  %v2160 = vpop.xlane.xlu0 %2159
  %v2161 = vsel %vm360, %v2117, 0.0
  %2162 = vadd.xlane.f32.xlu0 %v2161
  %v2163 = vpop.xlane.xlu0 %2162
  %v2164 = vsel %vm360, %v2118, 0.0
  %2165 = vadd.xlane.f32.xlu0 %v2164
  %v2166 = vpop.xlane.xlu0 %2165
  %v2167 = vadd.f32 %v2057, %v2060
  %v2168 = vadd.f32 %v2121, %v2124
  %v2169 = vadd.f32 %v2167, %v2063
  %v2170 = vadd.f32 %v2168, %v2127
  %v2171 = vadd.f32 %v2169, %v2066
  %v2172 = vadd.f32 %v2170, %v2130
  %v2173 = vadd.f32 %v2171, %v2069
  %v2174 = vadd.f32 %v2172, %v2133
  %v2175 = vadd.f32 %v2173, %v2072
  %v2176 = vadd.f32 %v2174, %v2136
  %v2177 = vadd.f32 %v2175, %v2075
  %v2178 = vadd.f32 %v2176, %v2139
  %v2179 = vadd.f32 %v2177, %v2078
  %v2180 = vadd.f32 %v2178, %v2142
  %v2181 = vadd.f32 %v2179, %v2081
  %v2182 = vadd.f32 %v2180, %v2145
  %v2183 = vadd.f32 %v2181, %v2084
  %v2184 = vadd.f32 %v2182, %v2148
  %v2185 = vadd.f32 %v2183, %v2087
  %v2186 = vadd.f32 %v2184, %v2151
  %v2187 = vadd.f32 %v2185, %v2090
  %v2188 = vadd.f32 %v2186, %v2154
  %v2189 = vadd.f32 %v2187, %v2093
  %v2190 = vadd.f32 %v2188, %v2157
  %v2191 = vadd.f32 %v2189, %v2096
  %v2192 = vadd.f32 %v2190, %v2160
  %v2193 = vadd.f32 %v2191, %v2099
  %v2194 = vadd.f32 %v2192, %v2163
  %v2195 = vadd.f32 %v2193, %v2102
  %v2196 = vadd.f32 %v2194, %v2166
  %v2197 = vmul.f32 %v2195, 0.002232143
  %v2198 = vmul.f32 %v2196, 0.002232143
  %v2199 = vmul.f32 %v2197, %v2197
  %v2200 = vsub.f32 %v2198, %v2199
  %v2201 = vmax.f32 %v2200, 0.0
  %v2202 = vadd.f32 %v2201, 1e-05
  %v2203 = vrsqrt.pop %v2202
  %v2204 = vmul.f32 %v2053, %v2203
  %v2205 = vmul.f32 %v2197, %v2204
  %v2206 = vsub.f32 %v2054, %v2205
  %2208 = vset.pattern.permute.xlu0 0
  %2209 = vperm.xlu0 %2208, %v2204
  %v2210 = vpop.permute.xlu0 %2209
  %v2212 = vmul.f32 %v1991, %v2210
  %v2213 = vmul.f32 %v1994, %v2210
  %v2214 = vmul.f32 %v1999, %v2210
  %v2215 = vmul.f32 %v2002, %v2210
  %v2216 = vmul.f32 %v2007, %v2210
  %v2217 = vmul.f32 %v2010, %v2210
  %v2218 = vmul.f32 %v2015, %v2210
  %v2219 = vmul.f32 %v2018, %v2210
  %v2220 = vmul.f32 %v2023, %v2210
  %v2221 = vmul.f32 %v2026, %v2210
  %v2222 = vmul.f32 %v2031, %v2210
  %v2223 = vmul.f32 %v2034, %v2210
  %v2224 = vmul.f32 %v2039, %v2210
  %v2225 = vmul.f32 %v2042, %v2210
  %v2226 = vmul.f32 %v2047, %v2210
  %v2227 = vmul.f32 %v2050, %v2210
  %2229 = vset.pattern.permute.xlu0 0
  %2230 = vperm.xlu0 %2229, %v2206
  %v2231 = vpop.permute.xlu0 %2230
  %v2233 = vadd.f32 %v2212, %v2231
  %v2234 = vadd.f32 %v2213, %v2231
  %v2235 = vadd.f32 %v2214, %v2231
  %v2236 = vadd.f32 %v2215, %v2231
  %v2237 = vadd.f32 %v2216, %v2231
  %v2238 = vadd.f32 %v2217, %v2231
  %v2239 = vadd.f32 %v2218, %v2231
  %v2240 = vadd.f32 %v2219, %v2231
  %v2241 = vadd.f32 %v2220, %v2231
  %v2242 = vadd.f32 %v2221, %v2231
  %v2243 = vadd.f32 %v2222, %v2231
  %v2244 = vadd.f32 %v2223, %v2231
  %v2245 = vadd.f32 %v2224, %v2231
  %v2246 = vadd.f32 %v2225, %v2231
  %v2247 = vadd.f32 %v2226, %v2231
  %v2248 = vadd.f32 %v2227, %v2231
  %v2249 = vmax.f32 %v2233, 0.0
  %v2250 = vmax.f32 %v2234, 0.0
  %v2251 = vmax.f32 %v2235, 0.0
  %v2252 = vmax.f32 %v2236, 0.0
  %v2253 = vmax.f32 %v2237, 0.0
  %v2254 = vmax.f32 %v2238, 0.0
  %v2255 = vmax.f32 %v2239, 0.0
  %v2256 = vmax.f32 %v2240, 0.0
  %v2257 = vmax.f32 %v2241, 0.0
  %v2258 = vmax.f32 %v2242, 0.0
  %v2259 = vmax.f32 %v2243, 0.0
  %v2260 = vmax.f32 %v2244, 0.0
  %v2261 = vmax.f32 %v2245, 0.0
  %v2262 = vmax.f32 %v2246, 0.0
  %v2263 = vmax.f32 %v2247, 0.0
  %v2264 = vmax.f32 %v2248, 0.0
  %2266 = vrot.lane.b32.xlu0 %v2264, 1
  %v2267 = vpop.permute.xlu0 %2266
  %v2269 = vsel %vm729, 0.0, %v2267
  %v2270 = vsel %vm738, %v2269, 0.0
  %v2271 = vsel %vm747, %v2270, %v2267
  %2273 = vrot.lane.b32.xlu0 %v2249, 127
  %v2274 = vpop.permute.xlu0 %2273
  %v2276 = vsel %vm788, %v2274, 0.0
  %v2277 = vsel %vm738, %v2276, %v2274
  %v2278 = vsel %vm805, %v2277, 0.0
  %v2279 = vld [vmem:[%s5] sm:$0xff]
  %v2280 = vld [vmem:[%s5 + $0x8] sm:$0xff]
  %v2281 = vld [vmem:[%s5 + $0x10] sm:$0xff]
  %v2282 = vld [vmem:[%s5 + $0x18] sm:$0xff]
  %v2283 = vpack.c.bf16 %v2250, %v2249
  %v2284 = vpack.c.bf16 %v2252, %v2251
  %v2285 = vpack.c.bf16 %v2254, %v2253
  %v2286 = vpack.c.bf16 %v2256, %v2255
  %v2287 = vpack.c.bf16 %v2258, %v2257
  %v2288 = vpack.c.bf16 %v2260, %v2259
  %v2289 = vpack.c.bf16 %v2262, %v2261
  %v2290 = vpack.c.bf16 %v2264, %v2263
  %v2291 = vpack.c.bf16 %v2278, %v2271
  %v2296 = vunpack.c.l.b16 %v2279
  %v2297 = vunpack.c.h.b16 %v2279
  %v2298 = vunpack.c.l.b16 %v2280
  %v2299 = vunpack.c.h.b16 %v2280
  %v2300 = vunpack.c.l.b16 %v2281
  %v2301 = vunpack.c.h.b16 %v2281
  %v2302 = vunpack.c.l.b16 %v2282
  %v2303 = vunpack.c.h.b16 %v2282
  %v2304 = vpack.c.b16 %v2298, %v2296
  %v2305 = vpack.c.b16 %v2299, %v2297
  %v2306 = vpack.c.b16 %v2302, %v2300
  %v2307 = vpack.c.b16 %v2303, %v2301
  %vm2310 = vcmask 130048
  %v2312 = vsel %vm2310, %v2305, 0
  %v2315 = vsel %vm2310, %v2307, 0
  %2317 = vmatprep.subr.bf16.mxu0 0
  %2318 = vmatpush1.bf16.msra.mxu0 %v2290
  %2319 = vmatprep.subr.bf16.mxu0 0
  %2320 = vmatpush1.bf16.msra.mxu0 %v2289
  %2321 = vmatprep.subr.bf16.mxu0 0
  %2322 = vmatpush1.bf16.msra.mxu0 %v2288
  %2323 = vmatprep.subr.bf16.mxu0 0
  %2324 = vmatpush1.bf16.msra.mxu0 %v2287
  %2325 = vmatprep.subr.bf16.mxu0 0
  %2326 = vmatpush1.bf16.msra.mxu0 %v2286
  %2327 = vmatprep.subr.bf16.mxu0 0
  %2328 = vmatpush1.bf16.msra.mxu0 %v2285
  %2329 = vmatprep.subr.bf16.mxu0 0
  %2330 = vmatpush1.bf16.msra.mxu0 %v2284
  %2331 = vmatprep.subr.bf16.mxu0 0
  %2332 = vmatpush1.bf16.msra.mxu0 %v2283
  %2333 = vmatprep.subr.bf16.mxu0 0
  %2334 = vmatpush2.bf16.msra.mxu0 0
  %2335 = vmatprep.subr.bf16.mxu0 0
  %2336 = vmatpush2.bf16.msra.mxu0 0
  %2337 = vmatprep.subr.bf16.mxu0 0
  %2338 = vmatpush2.bf16.msra.mxu0 0
  %2339 = vmatprep.subr.bf16.mxu0 0
  %2340 = vmatpush2.bf16.msra.mxu0 0
  %2341 = vmatprep.subr.bf16.mxu0 0
  %2342 = vmatpush2.bf16.msra.mxu0 0
  %2343 = vmatprep.subr.bf16.mxu0 0
  %2344 = vmatpush2.bf16.msra.mxu0 0
  %2345 = vmatprep.subr.bf16.mxu0 0
  %2346 = vmatpush2.bf16.msra.mxu0 0
  %2347 = vmatprep.subr.bf16.mxu0 0
  %2348 = vmatpush2.bf16.msra.mxu0 %v2291
  %2349 = vmatprep.mubr.bf16.mxu0 %v2312
  %2350 = vmatmul.mubr.bf16.gmra.mxu0 %v2304
  %v2351 = vpop.f32.mrf.mxu0
  %v2352 = vadd.f32 0.0, %v2351
  %v2353 = vpop.f32.mrf.mxu0
  %v2354 = vpop.f32.mrf.mxu0
  %v2355 = vadd.f32 0.0, %v2354
  %v2356 = vpop.f32.mrf.mxu0
  %2357 = vmatprep.mubr.bf16.mxu0 %v2315
  %2358 = vmatmul.mubr.bf16.gmra.mxu0 %v2306
  %v2359 = vpop.f32.mrf.mxu0
  %v2360 = vadd.f32 0.0, %v2359
  %v2361 = vpop.f32.mrf.mxu0
  %v2362 = vpop.f32.mrf.mxu0
  %v2363 = vadd.f32 0.0, %v2362
  %v2364 = vpop.f32.mrf.mxu0
  %2365 = vdwg.mxu0
  %v2366 = vtanh.pop %v2352
  %v2367 = vtanh.pop %v2355
  %v2368 = vtanh.pop %v2360
  %v2369 = vtanh.pop %v2363
  %2370 = vst.msk [vmem:[%s7] sm:$0xff] %vm360, %v2366
  %2371 = vst.msk [vmem:[%s7 + $0x8] sm:$0xff] %vm360, %v2367
  %2372 = vst.msk [vmem:[%s7 + $0x10] sm:$0xff] %vm360, %v2368
  %2373 = vst.msk [vmem:[%s7 + $0x18] sm:$0xff] %vm360, %v2369
  // Predicated region
  $region30: #{generator_forward.1} parent=0 // pred_check
    _
  $region31: #{generator_forward.1} parent=0 // pred_check_branch
    %2375 = sbr.rel (0) target = $region33
  $region32: #{generator_forward.1} parent=0 // pred_region
    _
  $region33: #{generator_forward.1} parent=0 // pred_fallthru
    _
  // Predicated region
  $region34: #{generator_forward.1} parent=0 // pred_check
    _
  $region35: #{generator_forward.1} parent=0 // pred_check_branch
    %2377 = sbr.rel (0) target = $region37
  $region36: #{generator_forward.1} parent=0 // pred_region
    _
  $region37: #{generator_forward.1} parent=0 // pred_fallthru
    _

</llo_original>
